<compile_context>
chip_gen: v7x
topology: tpu7x:2x2x1
jax: 0.10.0
libtpu: 0.0.40
codegen_flags: <defaults>
</compile_context>

<pallas_src>
import numpy as np
import jax
import jax.numpy as jnp
from jax.experimental import pallas as pl
from jax.experimental.pallas import tpu as pltpu

_INV_SQRT2 = 0.7071067811865475
_EPS = 1e-5


def _gelu_exact(x):
    # PyTorch nn.GELU default: exact erf-based GELU.
    return 0.5 * x * (1.0 + jax.lax.erf(x * _INV_SQRT2))


def _round_up(v, m):
    return ((v + m - 1) // m) * m


# -----------------------------------------------------------------------------
# Kernel
# -----------------------------------------------------------------------------
def down1d_kernel(x_ref, w1_ref, w2_ref, p_ref, o_ref):
    tb, cin, L = x_ref.shape
    cout, lh = o_ref.shape[1], o_ref.shape[2]     # real (unpadded) channels
    cout_p = p_ref.shape[1]                       # 128-aligned VMEM channel width
    m = tb * lh
    sl = 1 % m                                    # roll amounts (lh==1 degenerates cleanly)
    sr = (m - 1) % m

    # NCL -> NLC minor-dim swap in VMEM, then MaxPool1d(2) over row pairs.
    # (Pooling before the transpose would halve XLU transpose volume but needs a
    #  lane-strided read / lane compaction; kept in the known-good order here.)
    x_nlc = jnp.transpose(x_ref[...], (0, 2, 1))              # (tb, L, cin)
    pooled = jnp.max(x_nlc.reshape(m, 2, cin), axis=1)         # (m, cin) f32

    # Row-position masks: zero conv taps that fall off a sample's edge (also
    # blocks cross-sample bleed of rolled rows in the flat (tb*lh, C) layout).
    pos = jax.lax.broadcasted_iota(jnp.int32, (m, 1), 0) % lh
    mask_l = pos != 0
    mask_r = pos != (lh - 1)

    p = p_ref[...]                                             # (8, cout_p) f32
    b1, g1, be1 = p[0:1], p[1:2], p[2:3]
    b2, g2, be2 = p[3:4], p[4:5], p[5:6]

    def conv3(h, w_ref, b):
        # Conv1d(k=3, pad=1): ONE bf16 MXU matmul against the tap-concatenated
        # (K, 3*cout_p) weight; lane-aligned slices give the per-tap results,
        # combined via pltpu.roll (XLU slot) + edge masks -- no concatenates.
        hb = h.astype(jnp.bfloat16)
        y_all = jnp.dot(hb, w_ref[...], preferred_element_type=jnp.float32)
        y_l = y_all[:, 0:cout_p]
        y_c = y_all[:, cout_p:2 * cout_p]
        y_r = y_all[:, 2 * cout_p:3 * cout_p]
        y = y_c + b
        y = y + jnp.where(mask_l, pltpu.roll(y_l, shift=sl, axis=0), 0.0)
        y = y + jnp.where(mask_r, pltpu.roll(y_r, shift=sr, axis=0), 0.0)
        return y                                               # (m, cout_p) f32

    inv_n = 1.0 / float(lh * cout)     # GroupNorm counts only real channels

    def gn_gelu(y, g, be):
        # GroupNorm(num_groups=1) per sample, fused one-pass statistics.
        # Reduce over lh first (mostly plain vreg adds), then a single lane
        # reduce per sample -- keeps pressure off the 2 XLUs.
        # Padded channels contribute exactly 0 to both sums and stay 0 after
        # GN+GELU (their gamma/beta are 0).
        y3 = y.reshape(tb, lh, cout_p)
        s1 = jnp.sum(jnp.sum(y3, axis=1, keepdims=True), axis=2, keepdims=True)
        s2 = jnp.sum(jnp.sum(y3 * y3, axis=1, keepdims=True), axis=2, keepdims=True)
        mu = s1 * inv_n
        var = jnp.maximum(s2 * inv_n - mu * mu, 0.0)
        yn = (y3 - mu) * jax.lax.rsqrt(var + _EPS)
        yn = yn * g.reshape(1, 1, cout_p) + be.reshape(1, 1, cout_p)
        return _gelu_exact(yn).reshape(m, cout_p)

    h = gn_gelu(conv3(pooled, w1_ref, b1), g1, be1)
    h = gn_gelu(conv3(h, w2_ref, b2), g2, be2)

    # Drop padded channels in VMEM, then NLC -> NCL for the store; the HBM
    # output is exactly (N, Cout, Lh) -- no HBM-side pad/slice round trips.
    h3 = h.reshape(tb, lh, cout_p)[:, :, :cout]
    o_ref[...] = jnp.transpose(h3, (0, 2, 1)).astype(o_ref.dtype)


# -----------------------------------------------------------------------------
# Tiling / hardware helpers
# -----------------------------------------------------------------------------
def _hw_config():
    """Generation-aware VMEM budget & tiling targets (v5e / v6e / v7x)."""
    vmem_phys = 64 << 20                 # conservative default (v7x per-TC physical)
    try:
        vmem_phys = int(pltpu.get_tpu_info().vmem_capacity_bytes)
    except Exception:
        pass
    kind = ""
    try:
        kind = jax.devices()[0].device_kind.lower()
    except Exception:
        pass
    two_tc = ("v7" in kind) or ("7x" in kind)
    # Leave pipeline/compiler headroom below physical capacity:
    #   128 MiB parts (v5e/v6e) -> 96 MiB, 64 MiB parts (v7x) -> 48 MiB.
    vmem_limit = int(min(96 << 20, max(16 << 20, (vmem_phys * 3) // 4)))
    # Single-TC big-VMEM parts amortize the ~0.35us/step overhead with larger
    # blocks; on 2-TC parts keep blocks smaller so both cores get work.
    target_rows = 512 if two_tc else 1024
    return vmem_limit, target_rows, two_tc


def _choose_tiling(n, lh, per_sample_bytes, budget_bytes, target_rows, want_even_steps):
    """Samples per grid block and padded batch size."""
    tb_cap = int(max(1, min(n, budget_bytes // max(per_sample_bytes, 1))))
    tb_want = int(max(1, min(tb_cap, -(-target_rows // lh))))
    divisors = [d for d in range(1, tb_cap + 1) if n % d == 0]
    best_div = max(divisors) if divisors else 1
    if 2 * best_div >= tb_want:
        tb = best_div                    # divisor of n -> no batch padding
    else:
        tb = tb_want                     # pad n with zero samples (sliced off after)
    steps = -(-n // tb)
    if want_even_steps and n > 1 and steps % 2 == 1:
        # Split the 'parallel' axis evenly across the two v7x TensorCores.
        steps += 1
        tb = max(1, -(-n // steps))
        steps = max(2, -(-n // tb))
        if steps % 2 == 1:
            steps += 1
    return tb, tb * steps


def _prep_weight(w, ci_p, cout, cout_p):
    """(Cout, Ci, 3) PyTorch OIH -> tap-concatenated (ci_p, 3*cout_p) bf16.
    Columns [k*cout_p:(k+1)*cout_p] hold tap k; padded rows/cols are zero."""
    ci = w.shape[1]
    wk = jnp.transpose(w, (1, 2, 0))                            # (Ci, 3, Cout)
    wk = jnp.pad(wk, ((0, ci_p - ci), (0, 0), (0, cout_p - cout)))
    return wk.reshape(ci_p, 3 * cout_p).astype(jnp.bfloat16)


# -----------------------------------------------------------------------------
# Wrapper
# -----------------------------------------------------------------------------
def _down_1d_call(x_ncl, params, *, single_buffer_weights):
    w1, b1, g1, be1, w2, b2, g2, be2 = params
    N, Cin, L = x_ncl.shape
    Cout = w1.shape[0]
    if L % 2:                             # MaxPool1d(2) floor mode drops last column
        x_ncl = x_ncl[:, :, : L - 1]
        L -= 1
    Lh = L // 2
    cout_p = _round_up(Cout, 128)

    # Tap-concatenated bf16 weights (one MXU matmul per conv) and the packed
    # bias/gamma/beta operand (one lane-dense (8, cout_p) tile instead of six).
    w1_k = _prep_weight(w1, Cin, Cout, cout_p)                  # (Cin,    3*cout_p)
    w2_k = _prep_weight(w2, cout_p, Cout, cout_p)               # (cout_p, 3*cout_p)
    zeros = jnp.zeros_like(b1)
    pk = jnp.stack([b1, g1, be1, b2, g2, be2, zeros, zeros], axis=0)
    if cout_p != Cout:
        pk = jnp.pad(pk, ((0, 0), (0, cout_p - Cout)))

    vmem_limit, target_rows, two_tc = _hw_config()

    wbuf = 1 if single_buffer_weights else 2
    weight_bytes = wbuf * (2 * (w1_k.size + w2_k.size) + 4 * pk.size)
    # Honest per-sample VMEM estimate: double-buffered in/out blocks + the f32 /
    # bf16 temporaries the kernel body materialises.
    per_sample = (
        4 * Cin * L * 3          # x block (2 pipeline bufs) + NLC-transpose temp
        + 4 * Cin * Lh * 2       # pooled rows (+ bf16 copy, rounded up)
        + 4 * cout_p * Lh * 9    # y_all (3*cout_p lanes) + ~6 live f32 temps
        + 2 * cout_p * Lh        # bf16 activations for the layer-2 matmul
        + 4 * Cout * Lh * 3      # out block (2 pipeline bufs) + store-transpose temp
    )
    budget = max(1 << 20, vmem_limit - weight_bytes - (2 << 20))
    tb, n_pad = _choose_tiling(N, Lh, per_sample, budget, target_rows, two_tc)

    xp = x_ncl if n_pad == N else jnp.pad(x_ncl, ((0, n_pad - N), (0, 0), (0, 0)))

    # Constant-index operands only need a single pipeline buffer.
    wkw = dict(pipeline_mode=pl.Buffered(1)) if single_buffer_weights else {}

    out = pl.pallas_call(
        down1d_kernel,
        out_shape=jax.ShapeDtypeStruct((n_pad, Cout, Lh), jnp.float32),
        grid=(n_pad // tb,),
        in_specs=[
            pl.BlockSpec((tb, Cin, L), lambda i: (i, 0, 0)),
            pl.BlockSpec((Cin, 3 * cout_p), lambda i: (0, 0), **wkw),
            pl.BlockSpec((cout_p, 3 * cout_p), lambda i: (0, 0), **wkw),
            pl.BlockSpec((8, cout_p), lambda i: (0, 0), **wkw),
        ],
        out_specs=pl.BlockSpec((tb, Cout, Lh), lambda i: (i, 0, 0)),
        compiler_params=pltpu.CompilerParams(
            dimension_semantics=("parallel",),
            vmem_limit_bytes=int(vmem_limit),
        ),
    )(xp, w1_k, w2_k, pk)

    return out if n_pad == N else out[:N]


_BUFFERED_OK = None   # None = unknown, True/False after the first attempt.


def down_1d(x_ncl, params):
    """x_ncl: (N, Cin, L) float32 (PyTorch NCL). Returns (N, Cout, L//2) float32.

    Prefers single-buffered constant weight specs (pl.Buffered(1)); falls back
    to default double-buffering if this JAX/Mosaic build rejects the kwarg.
    (Call eagerly for the fallback to be able to catch compile-time errors.)
    """
    global _BUFFERED_OK
    if _BUFFERED_OK is not False:
        try:
            out = _down_1d_call(x_ncl, params, single_buffer_weights=True)
            _BUFFERED_OK = True
            return out
        except Exception:
            if _BUFFERED_OK is True:
                raise
            _BUFFERED_OK = False
    return _down_1d_call(x_ncl, params, single_buffer_weights=False)


# -----------------------------------------------------------------------------
# Pure-JAX reference (PyTorch semantics) & params
# -----------------------------------------------------------------------------
def ref_forward(x_ncl, params):
    w1, b1, g1, be1, w2, b2, g2, be2 = params
    N, C, L = x_ncl.shape
    Lh = L // 2
    h = jnp.max(x_ncl[:, :, : 2 * Lh].reshape(N, C, Lh, 2), axis=-1)

    def conv1d(h, w, b):
        y = jax.lax.conv_general_dilated(
            h, w, window_strides=(1,), padding=((1, 1),),
            dimension_numbers=("NCH", "OIH", "NCH"))
        return y + b[None, :, None]

    def gn(h, g, be):
        mu = h.mean(axis=(1, 2), keepdims=True)
        var = ((h - mu) ** 2).mean(axis=(1, 2), keepdims=True)
        hn = (h - mu) / jnp.sqrt(var + _EPS)
        return hn * g[None, :, None] + be[None, :, None]

    h = _gelu_exact(gn(conv1d(h, w1, b1), g1, be1))
    h = _gelu_exact(gn(conv1d(h, w2, b2), g2, be2))
    return h


def init_params(key, in_channels, out_channels):
    k1, k2, k3, k4 = jax.random.split(key, 4)
    scale1 = 1.0 / np.sqrt(in_channels * 3)
    scale2 = 1.0 / np.sqrt(out_channels * 3)
    w1 = jax.random.normal(k1, (out_channels, in_channels, 3), jnp.float32) * scale1
    b1 = jax.random.normal(k2, (out_channels,), jnp.float32) * scale1
    w2 = jax.random.normal(k3, (out_channels, out_channels, 3), jnp.float32) * scale2
    b2 = jax.random.normal(k4, (out_channels,), jnp.float32) * scale2
    # GroupNorm affine params at PyTorch defaults (weight=1, bias=0).
    g1 = jnp.ones((out_channels,), jnp.float32)
    be1 = jnp.zeros((out_channels,), jnp.float32)
    g2 = jnp.ones((out_channels,), jnp.float32)
    be2 = jnp.zeros((out_channels,), jnp.float32)
    return (w1, b1, g1, be1, w2, b2, g2, be2)


if __name__ == "__main__":
    key = jax.random.PRNGKey(0)

    def run_case(k, N, Cin, Cout, L):
        kx, kp = jax.random.split(k)
        x = jax.random.normal(kx, (N, Cin, L), jnp.float32)
        params = init_params(kp, Cin, Cout)
        out = jax.block_until_ready(down_1d(x, params))       # eager: fallback-safe
        ref = jax.block_until_ready(ref_forward(x, params))
        assert out.shape == (N, Cout, L // 2), out.shape
        # Tolerance accounts for bf16 matmul inputs (f32 accumulation) in the kernel.
        np.testing.assert_allclose(np.asarray(out), np.asarray(ref), rtol=2e-2, atol=2e-2)

    k1, k2 = jax.random.split(key)
    run_case(k1, N=2, Cin=4, Cout=8, L=16)    # primary small case
    run_case(k2, N=3, Cin=8, Cout=8, L=17)    # odd N (batch-pad path) + odd L (pool floor)

    print("KERNEL_OK")
</pallas_src>

<mosaic_0001>
module attributes {stable_mosaic.version = 11 : i64} {
  func.func @down1d_kernel(%arg0: i32, %arg1: memref<2x4x16xf32, #tpu.memory_space<vmem>>, %arg2: memref<4x384xbf16, #tpu.memory_space<vmem>>, %arg3: memref<128x384xbf16, #tpu.memory_space<vmem>>, %arg4: memref<8x128xf32, #tpu.memory_space<vmem>>, %arg5: memref<2x8x8xf32, #tpu.memory_space<vmem>>) attributes {dimension_semantics = [#tpu.dimension_semantics<parallel>], iteration_bounds = array<i64: 1>, scalar_prefetch = 0 : i64, scratch_operands = 0 : i64, tpu.core_type = #tpu.core_type<tc>, window_params = [{transform_indices = @transform_0, window_bounds = array<i64: 2, 4, 16>}, {pipeline_mode = #tpu.pipeline_mode<synchronous>, transform_indices = @transform_1, window_bounds = array<i64: 4, 384>}, {pipeline_mode = #tpu.pipeline_mode<synchronous>, transform_indices = @transform_2, window_bounds = array<i64: 128, 384>}, {pipeline_mode = #tpu.pipeline_mode<synchronous>, transform_indices = @transform_3, window_bounds = array<i64: 8, 128>}, {transform_indices = @transform_4, window_bounds = array<i64: 2, 8, 8>}]} {
    %c0 = arith.constant 0 : index
    %c0_0 = arith.constant 0 : index
    %c0_1 = arith.constant 0 : index
    %0 = vector.load %arg1[%c0, %c0_0, %c0_1] : memref<2x4x16xf32, #tpu.memory_space<vmem>>, vector<2x4x16xf32>
    %1 = tpu.transpose %0, [0, 2, 1] : vector<2x4x16xf32> -> vector<2x16x4xf32>
    %2 = vector.shape_cast %1 : vector<2x16x4xf32> to vector<16x2x4xf32>
    %cst = arith.constant dense<0xFF800000> : vector<16x4xf32>
    %3 = vector.multi_reduction <maximumf>, %2, %cst [1] : vector<16x2x4xf32> to vector<16x4xf32>
    %4 = tpu.iota {dimensions = array<i32: 0>} : vector<16x1xi32>
    %c8_i32 = arith.constant 8 : i32
    %c0_i32 = arith.constant 0 : i32
    %5 = arith.cmpi eq, %c8_i32, %c0_i32 : i32
    %c1_i32 = arith.constant 1 : i32
    %6 = arith.select %5, %c1_i32, %c8_i32 : i32
    %7 = vector.broadcast %6 : i32 to vector<16x1xi32>
    %8 = arith.remsi %4, %7 : vector<16x1xi32>
    %c0_i32_2 = arith.constant 0 : i32
    %9 = vector.broadcast %c0_i32_2 : i32 to vector<16x1xi32>
    %10 = arith.cmpi ne, %8, %9 : vector<16x1xi32>
    %c0_i32_3 = arith.constant 0 : i32
    %11 = vector.broadcast %c0_i32_3 : i32 to vector<16x1xi32>
    %12 = arith.cmpi slt, %8, %11 : vector<16x1xi32>
    %c0_i32_4 = arith.constant 0 : i32
    %13 = arith.cmpi slt, %6, %c0_i32_4 : i32
    %14 = vector.broadcast %13 : i1 to vector<16x1xi1>
    %15 = vector.broadcast %14 : vector<16x1xi1> to vector<16x1xi1>
    %16 = arith.xori %12, %15 : vector<16x1xi1>
    %17 = arith.andi %16, %10 : vector<16x1xi1>
    %18 = vector.broadcast %6 : i32 to vector<16x1xi32>
    %19 = arith.addi %8, %18 : vector<16x1xi32>
    %20 = arith.select %17, %19, %8 : vector<16x1xi1>, vector<16x1xi32>
    %c0_i32_5 = arith.constant 0 : i32
    %21 = vector.broadcast %c0_i32_5 : i32 to vector<16x1xi32>
    %22 = arith.cmpi ne, %20, %21 : vector<16x1xi32>
    %c7_i32 = arith.constant 7 : i32
    %23 = vector.broadcast %c7_i32 : i32 to vector<16x1xi32>
    %24 = arith.cmpi ne, %20, %23 : vector<16x1xi32>
    %c0_6 = arith.constant 0 : index
    %c0_7 = arith.constant 0 : index
    %25 = vector.load %arg4[%c0_6, %c0_7] : memref<8x128xf32, #tpu.memory_space<vmem>>, vector<8x128xf32>
    %26 = vector.extract_strided_slice %25 {offsets = [0, 0], sizes = [1, 128], strides = [1, 1]} : vector<8x128xf32> to vector<1x128xf32>
    %27 = vector.extract_strided_slice %25 {offsets = [1, 0], sizes = [1, 128], strides = [1, 1]} : vector<8x128xf32> to vector<1x128xf32>
    %28 = vector.extract_strided_slice %25 {offsets = [2, 0], sizes = [1, 128], strides = [1, 1]} : vector<8x128xf32> to vector<1x128xf32>
    %29 = vector.extract_strided_slice %25 {offsets = [3, 0], sizes = [1, 128], strides = [1, 1]} : vector<8x128xf32> to vector<1x128xf32>
    %30 = vector.extract_strided_slice %25 {offsets = [4, 0], sizes = [1, 128], strides = [1, 1]} : vector<8x128xf32> to vector<1x128xf32>
    %31 = vector.extract_strided_slice %25 {offsets = [5, 0], sizes = [1, 128], strides = [1, 1]} : vector<8x128xf32> to vector<1x128xf32>
    %32 = arith.truncf %3 : vector<16x4xf32> to vector<16x4xbf16>
    %c0_8 = arith.constant 0 : index
    %c0_9 = arith.constant 0 : index
    %33 = vector.load %arg2[%c0_8, %c0_9] : memref<4x384xbf16, #tpu.memory_space<vmem>>, vector<4x384xbf16>
    %cst_10 = arith.constant dense<0.000000e+00> : vector<16x384xf32>
    %34 = tpu.matmul %32, %33, %cst_10 {dimension_numbers = #tpu.dot_dimension_numbers<[1], [0], [0], [1], [0, 0, 1, 1], [], []>} : vector<16x4xbf16>, vector<4x384xbf16>, vector<16x384xf32> -> vector<16x384xf32>
    %35 = vector.extract_strided_slice %34 {offsets = [0, 0], sizes = [16, 128], strides = [1, 1]} : vector<16x384xf32> to vector<16x128xf32>
    %36 = vector.extract_strided_slice %34 {offsets = [0, 128], sizes = [16, 128], strides = [1, 1]} : vector<16x384xf32> to vector<16x128xf32>
    %37 = vector.extract_strided_slice %34 {offsets = [0, 256], sizes = [16, 128], strides = [1, 1]} : vector<16x384xf32> to vector<16x128xf32>
    %38 = vector.broadcast %26 : vector<1x128xf32> to vector<16x128xf32>
    %39 = arith.addf %36, %38 : vector<16x128xf32>
    %c1_i32_11 = arith.constant 1 : i32
    %40 = tpu.dynamic_rotate %35 by %c1_i32_11 dim 0 : vector<16x128xf32>, i32 -> vector<16x128xf32>
    %cst_12 = arith.constant 0.000000e+00 : f32
    %41 = vector.shape_cast %22 : vector<16x1xi1> to vector<16x1xi1>
    %42 = vector.broadcast %41 : vector<16x1xi1> to vector<16x128xi1>
    %43 = vector.broadcast %cst_12 : f32 to vector<16x128xf32>
    %44 = arith.select %42, %40, %43 : vector<16x128xi1>, vector<16x128xf32>
    %45 = arith.addf %39, %44 : vector<16x128xf32>
    %c15_i32 = arith.constant 15 : i32
    %46 = tpu.dynamic_rotate %37 by %c15_i32 dim 0 : vector<16x128xf32>, i32 -> vector<16x128xf32>
    %cst_13 = arith.constant 0.000000e+00 : f32
    %47 = vector.shape_cast %24 : vector<16x1xi1> to vector<16x1xi1>
    %48 = vector.broadcast %47 : vector<16x1xi1> to vector<16x128xi1>
    %49 = vector.broadcast %cst_13 : f32 to vector<16x128xf32>
    %50 = arith.select %48, %46, %49 : vector<16x128xi1>, vector<16x128xf32>
    %51 = arith.addf %45, %50 : vector<16x128xf32>
    %52 = vector.shape_cast %51 : vector<16x128xf32> to vector<2x8x128xf32>
    %cst_14 = arith.constant dense<0.000000e+00> : vector<2x128xf32>
    %53 = vector.multi_reduction <add>, %52, %cst_14 [1] : vector<2x8x128xf32> to vector<2x128xf32>
    %54 = vector.shape_cast %53 : vector<2x128xf32> to vector<2x1x128xf32>
    %cst_15 = arith.constant dense<0.000000e+00> : vector<2x1xf32>
    %55 = vector.multi_reduction <add>, %54, %cst_15 [2] : vector<2x1x128xf32> to vector<2x1xf32>
    %56 = vector.shape_cast %55 : vector<2x1xf32> to vector<2x1x1xf32>
    %57 = arith.mulf %52, %52 : vector<2x8x128xf32>
    %cst_16 = arith.constant dense<0.000000e+00> : vector<2x128xf32>
    %58 = vector.multi_reduction <add>, %57, %cst_16 [1] : vector<2x8x128xf32> to vector<2x128xf32>
    %59 = vector.shape_cast %58 : vector<2x128xf32> to vector<2x1x128xf32>
    %cst_17 = arith.constant dense<0.000000e+00> : vector<2x1xf32>
    %60 = vector.multi_reduction <add>, %59, %cst_17 [2] : vector<2x1x128xf32> to vector<2x1xf32>
    %61 = vector.shape_cast %60 : vector<2x1xf32> to vector<2x1x1xf32>
    %cst_18 = arith.constant 1.562500e-02 : f32
    %62 = vector.broadcast %cst_18 : f32 to vector<2x1x1xf32>
    %63 = arith.mulf %56, %62 : vector<2x1x1xf32>
    %cst_19 = arith.constant 1.562500e-02 : f32
    %64 = vector.broadcast %cst_19 : f32 to vector<2x1x1xf32>
    %65 = arith.mulf %61, %64 : vector<2x1x1xf32>
    %66 = arith.mulf %63, %63 : vector<2x1x1xf32>
    %67 = arith.subf %65, %66 : vector<2x1x1xf32>
    %cst_20 = arith.constant 0.000000e+00 : f32
    %68 = vector.broadcast %cst_20 : f32 to vector<2x1x1xf32>
    %69 = arith.maximumf %67, %68 : vector<2x1x1xf32>
    %70 = vector.broadcast %63 : vector<2x1x1xf32> to vector<2x8x128xf32>
    %71 = arith.subf %52, %70 : vector<2x8x128xf32>
    %cst_21 = arith.constant 9.99999974E-6 : f32
    %72 = vector.broadcast %cst_21 : f32 to vector<2x1x1xf32>
    %73 = arith.addf %69, %72 : vector<2x1x1xf32>
    %74 = math.rsqrt %73 : vector<2x1x1xf32>
    %75 = vector.broadcast %74 : vector<2x1x1xf32> to vector<2x8x128xf32>
    %76 = arith.mulf %71, %75 : vector<2x8x128xf32>
    %77 = vector.shape_cast %27 : vector<1x128xf32> to vector<1x1x128xf32>
    %78 = vector.broadcast %77 : vector<1x1x128xf32> to vector<2x8x128xf32>
    %79 = arith.mulf %76, %78 : vector<2x8x128xf32>
    %80 = vector.shape_cast %28 : vector<1x128xf32> to vector<1x1x128xf32>
    %81 = vector.broadcast %80 : vector<1x1x128xf32> to vector<2x8x128xf32>
    %82 = arith.addf %79, %81 : vector<2x8x128xf32>
    %cst_22 = arith.constant 5.000000e-01 : f32
    %83 = vector.broadcast %cst_22 : f32 to vector<2x8x128xf32>
    %84 = arith.mulf %83, %82 : vector<2x8x128xf32>
    %cst_23 = arith.constant 0.707106769 : f32
    %85 = vector.broadcast %cst_23 : f32 to vector<2x8x128xf32>
    %86 = arith.mulf %82, %85 : vector<2x8x128xf32>
    %87 = math.erf %86 : vector<2x8x128xf32>
    %cst_24 = arith.constant 1.000000e+00 : f32
    %88 = vector.broadcast %cst_24 : f32 to vector<2x8x128xf32>
    %89 = arith.addf %88, %87 : vector<2x8x128xf32>
    %90 = arith.mulf %84, %89 : vector<2x8x128xf32>
    %91 = vector.shape_cast %90 : vector<2x8x128xf32> to vector<16x128xf32>
    %92 = arith.truncf %91 : vector<16x128xf32> to vector<16x128xbf16>
    %c0_25 = arith.constant 0 : index
    %c0_26 = arith.constant 0 : index
    %93 = vector.load %arg3[%c0_25, %c0_26] : memref<128x384xbf16, #tpu.memory_space<vmem>>, vector<128x384xbf16>
    %cst_27 = arith.constant dense<0.000000e+00> : vector<16x384xf32>
    %94 = tpu.matmul %92, %93, %cst_27 {dimension_numbers = #tpu.dot_dimension_numbers<[1], [0], [0], [1], [0, 0, 1, 1], [], []>} : vector<16x128xbf16>, vector<128x384xbf16>, vector<16x384xf32> -> vector<16x384xf32>
    %95 = vector.extract_strided_slice %94 {offsets = [0, 0], sizes = [16, 128], strides = [1, 1]} : vector<16x384xf32> to vector<16x128xf32>
    %96 = vector.extract_strided_slice %94 {offsets = [0, 128], sizes = [16, 128], strides = [1, 1]} : vector<16x384xf32> to vector<16x128xf32>
    %97 = vector.extract_strided_slice %94 {offsets = [0, 256], sizes = [16, 128], strides = [1, 1]} : vector<16x384xf32> to vector<16x128xf32>
    %98 = vector.broadcast %29 : vector<1x128xf32> to vector<16x128xf32>
    %99 = arith.addf %96, %98 : vector<16x128xf32>
    %c1_i32_28 = arith.constant 1 : i32
    %100 = tpu.dynamic_rotate %95 by %c1_i32_28 dim 0 : vector<16x128xf32>, i32 -> vector<16x128xf32>
    %cst_29 = arith.constant 0.000000e+00 : f32
    %101 = vector.shape_cast %22 : vector<16x1xi1> to vector<16x1xi1>
    %102 = vector.broadcast %101 : vector<16x1xi1> to vector<16x128xi1>
    %103 = vector.broadcast %cst_29 : f32 to vector<16x128xf32>
    %104 = arith.select %102, %100, %103 : vector<16x128xi1>, vector<16x128xf32>
    %105 = arith.addf %99, %104 : vector<16x128xf32>
    %c15_i32_30 = arith.constant 15 : i32
    %106 = tpu.dynamic_rotate %97 by %c15_i32_30 dim 0 : vector<16x128xf32>, i32 -> vector<16x128xf32>
    %cst_31 = arith.constant 0.000000e+00 : f32
    %107 = vector.shape_cast %24 : vector<16x1xi1> to vector<16x1xi1>
    %108 = vector.broadcast %107 : vector<16x1xi1> to vector<16x128xi1>
    %109 = vector.broadcast %cst_31 : f32 to vector<16x128xf32>
    %110 = arith.select %108, %106, %109 : vector<16x128xi1>, vector<16x128xf32>
    %111 = arith.addf %105, %110 : vector<16x128xf32>
    %112 = vector.shape_cast %111 : vector<16x128xf32> to vector<2x8x128xf32>
    %cst_32 = arith.constant dense<0.000000e+00> : vector<2x128xf32>
    %113 = vector.multi_reduction <add>, %112, %cst_32 [1] : vector<2x8x128xf32> to vector<2x128xf32>
    %114 = vector.shape_cast %113 : vector<2x128xf32> to vector<2x1x128xf32>
    %cst_33 = arith.constant dense<0.000000e+00> : vector<2x1xf32>
    %115 = vector.multi_reduction <add>, %114, %cst_33 [2] : vector<2x1x128xf32> to vector<2x1xf32>
    %116 = vector.shape_cast %115 : vector<2x1xf32> to vector<2x1x1xf32>
    %117 = arith.mulf %112, %112 : vector<2x8x128xf32>
    %cst_34 = arith.constant dense<0.000000e+00> : vector<2x128xf32>
    %118 = vector.multi_reduction <add>, %117, %cst_34 [1] : vector<2x8x128xf32> to vector<2x128xf32>
    %119 = vector.shape_cast %118 : vector<2x128xf32> to vector<2x1x128xf32>
    %cst_35 = arith.constant dense<0.000000e+00> : vector<2x1xf32>
    %120 = vector.multi_reduction <add>, %119, %cst_35 [2] : vector<2x1x128xf32> to vector<2x1xf32>
    %121 = vector.shape_cast %120 : vector<2x1xf32> to vector<2x1x1xf32>
    %cst_36 = arith.constant 1.562500e-02 : f32
    %122 = vector.broadcast %cst_36 : f32 to vector<2x1x1xf32>
    %123 = arith.mulf %116, %122 : vector<2x1x1xf32>
    %cst_37 = arith.constant 1.562500e-02 : f32
    %124 = vector.broadcast %cst_37 : f32 to vector<2x1x1xf32>
    %125 = arith.mulf %121, %124 : vector<2x1x1xf32>
    %126 = arith.mulf %123, %123 : vector<2x1x1xf32>
    %127 = arith.subf %125, %126 : vector<2x1x1xf32>
    %cst_38 = arith.constant 0.000000e+00 : f32
    %128 = vector.broadcast %cst_38 : f32 to vector<2x1x1xf32>
    %129 = arith.maximumf %127, %128 : vector<2x1x1xf32>
    %130 = vector.broadcast %123 : vector<2x1x1xf32> to vector<2x8x128xf32>
    %131 = arith.subf %112, %130 : vector<2x8x128xf32>
    %cst_39 = arith.constant 9.99999974E-6 : f32
    %132 = vector.broadcast %cst_39 : f32 to vector<2x1x1xf32>
    %133 = arith.addf %129, %132 : vector<2x1x1xf32>
    %134 = math.rsqrt %133 : vector<2x1x1xf32>
    %135 = vector.broadcast %134 : vector<2x1x1xf32> to vector<2x8x128xf32>
    %136 = arith.mulf %131, %135 : vector<2x8x128xf32>
    %137 = vector.shape_cast %30 : vector<1x128xf32> to vector<1x1x128xf32>
    %138 = vector.broadcast %137 : vector<1x1x128xf32> to vector<2x8x128xf32>
    %139 = arith.mulf %136, %138 : vector<2x8x128xf32>
    %140 = vector.shape_cast %31 : vector<1x128xf32> to vector<1x1x128xf32>
    %141 = vector.broadcast %140 : vector<1x1x128xf32> to vector<2x8x128xf32>
    %142 = arith.addf %139, %141 : vector<2x8x128xf32>
    %cst_40 = arith.constant 5.000000e-01 : f32
    %143 = vector.broadcast %cst_40 : f32 to vector<2x8x128xf32>
    %144 = arith.mulf %143, %142 : vector<2x8x128xf32>
    %cst_41 = arith.constant 0.707106769 : f32
    %145 = vector.broadcast %cst_41 : f32 to vector<2x8x128xf32>
    %146 = arith.mulf %142, %145 : vector<2x8x128xf32>
    %147 = math.erf %146 : vector<2x8x128xf32>
    %cst_42 = arith.constant 1.000000e+00 : f32
    %148 = vector.broadcast %cst_42 : f32 to vector<2x8x128xf32>
    %149 = arith.addf %148, %147 : vector<2x8x128xf32>
    %150 = arith.mulf %144, %149 : vector<2x8x128xf32>
    %151 = vector.shape_cast %150 : vector<2x8x128xf32> to vector<16x128xf32>
    %152 = vector.shape_cast %151 : vector<16x128xf32> to vector<2x8x128xf32>
    %153 = vector.extract_strided_slice %152 {offsets = [0, 0, 0], sizes = [2, 8, 8], strides = [1, 1, 1]} : vector<2x8x128xf32> to vector<2x8x8xf32>
    %154 = tpu.transpose %153, [0, 2, 1] : vector<2x8x8xf32> -> vector<2x8x8xf32>
    %c0_43 = arith.constant 0 : index
    %c0_44 = arith.constant 0 : index
    %c0_45 = arith.constant 0 : index
    %155 = vector.load %arg5[%c0_43, %c0_44, %c0_45] : memref<2x8x8xf32, #tpu.memory_space<vmem>>, vector<2x8x8xf32>
    tpu.vector_store %arg5[%c0_43, %c0_44, %c0_45], %154 {strides = array<i32>} : memref<2x8x8xf32, #tpu.memory_space<vmem>>, vector<2x8x8xf32>,
    return
  }
  func.func @transform_0(%arg0: i32) -> (i32, i32, i32) {
    %c0_i32 = arith.constant 0 : i32
    %c0_i32_0 = arith.constant 0 : i32
    %c0_i32_1 = arith.constant 0 : i32
    return %arg0, %c0_i32, %c0_i32_0 : i32, i32, i32
  }
  func.func @transform_1(%arg0: i32) -> (i32, i32) {
    %c0_i32 = arith.constant 0 : i32
    %c0_i32_0 = arith.constant 0 : i32
    %c0_i32_1 = arith.constant 0 : i32
    return %c0_i32, %c0_i32_0 : i32, i32
  }
  func.func @transform_2(%arg0: i32) -> (i32, i32) {
    %c0_i32 = arith.constant 0 : i32
    %c0_i32_0 = arith.constant 0 : i32
    %c0_i32_1 = arith.constant 0 : i32
    return %c0_i32, %c0_i32_0 : i32, i32
  }
  func.func @transform_3(%arg0: i32) -> (i32, i32) {
    %c0_i32 = arith.constant 0 : i32
    %c0_i32_0 = arith.constant 0 : i32
    %c0_i32_1 = arith.constant 0 : i32
    return %c0_i32, %c0_i32_0 : i32, i32
  }
  func.func @transform_4(%arg0: i32) -> (i32, i32, i32) {
    %c0_i32 = arith.constant 0 : i32
    %c0_i32_0 = arith.constant 0 : i32
    %c0_i32_1 = arith.constant 0 : i32
    return %arg0, %c0_i32, %c0_i32_0 : i32, i32, i32
  }
}

module attributes {stable_mosaic.version = 11 : i64} {
  func.func @down1d_kernel(%arg0: i32, %arg1: memref<2x4x16xf32, #tpu.memory_space<vmem>>, %arg2: memref<4x384xbf16, #tpu.memory_space<vmem>>, %arg3: memref<128x384xbf16, #tpu.memory_space<vmem>>, %arg4: memref<8x128xf32, #tpu.memory_space<vmem>>, %arg5: memref<2x8x8xf32, #tpu.memory_space<vmem>>) attributes {dimension_semantics = [#tpu.dimension_semantics<parallel>], iteration_bounds = array<i64: 1>, scalar_prefetch = 0 : i64, scratch_operands = 0 : i64, tpu.core_type = #tpu.core_type<tc>, window_params = [{transform_indices = @transform_0, window_bounds = array<i64: 2, 4, 16>}, {pipeline_mode = #tpu.pipeline_mode<synchronous>, transform_indices = @transform_1, window_bounds = array<i64: 4, 384>}, {pipeline_mode = #tpu.pipeline_mode<synchronous>, transform_indices = @transform_2, window_bounds = array<i64: 128, 384>}, {pipeline_mode = #tpu.pipeline_mode<synchronous>, transform_indices = @transform_3, window_bounds = array<i64: 8, 128>}, {transform_indices = @transform_4, window_bounds = array<i64: 2, 8, 8>}]} {
    %c0 = arith.constant 0 : index
    %c0_0 = arith.constant 0 : index
    %c0_1 = arith.constant 0 : index
    %0 = vector.load %arg1[%c0, %c0_0, %c0_1] : memref<2x4x16xf32, #tpu.memory_space<vmem>>, vector<2x4x16xf32>
    %1 = tpu.transpose %0, [0, 2, 1] : vector<2x4x16xf32> -> vector<2x16x4xf32>
    %2 = vector.shape_cast %1 : vector<2x16x4xf32> to vector<16x2x4xf32>
    %cst = arith.constant dense<0xFF800000> : vector<16x4xf32>
    %3 = vector.multi_reduction <maximumf>, %2, %cst [1] : vector<16x2x4xf32> to vector<16x4xf32>
    %4 = tpu.iota {dimensions = array<i32: 0>} : vector<16x1xi32>
    %c8_i32 = arith.constant 8 : i32
    %c0_i32 = arith.constant 0 : i32
    %5 = arith.cmpi eq, %c8_i32, %c0_i32 : i32
    %c1_i32 = arith.constant 1 : i32
    %6 = arith.select %5, %c1_i32, %c8_i32 : i32
    %7 = vector.broadcast %6 : i32 to vector<16x1xi32>
    %8 = arith.remsi %4, %7 : vector<16x1xi32>
    %c0_i32_2 = arith.constant 0 : i32
    %9 = vector.broadcast %c0_i32_2 : i32 to vector<16x1xi32>
    %10 = arith.cmpi ne, %8, %9 : vector<16x1xi32>
    %c0_i32_3 = arith.constant 0 : i32
    %11 = vector.broadcast %c0_i32_3 : i32 to vector<16x1xi32>
    %12 = arith.cmpi slt, %8, %11 : vector<16x1xi32>
    %c0_i32_4 = arith.constant 0 : i32
    %13 = arith.cmpi slt, %6, %c0_i32_4 : i32
    %14 = vector.broadcast %13 : i1 to vector<16x1xi1>
    %15 = vector.broadcast %14 : vector<16x1xi1> to vector<16x1xi1>
    %16 = arith.xori %12, %15 : vector<16x1xi1>
    %17 = arith.andi %16, %10 : vector<16x1xi1>
    %18 = vector.broadcast %6 : i32 to vector<16x1xi32>
    %19 = arith.addi %8, %18 : vector<16x1xi32>
    %20 = arith.select %17, %19, %8 : vector<16x1xi1>, vector<16x1xi32>
    %c0_i32_5 = arith.constant 0 : i32
    %21 = vector.broadcast %c0_i32_5 : i32 to vector<16x1xi32>
    %22 = arith.cmpi ne, %20, %21 : vector<16x1xi32>
    %c7_i32 = arith.constant 7 : i32
    %23 = vector.broadcast %c7_i32 : i32 to vector<16x1xi32>
    %24 = arith.cmpi ne, %20, %23 : vector<16x1xi32>
    %c0_6 = arith.constant 0 : index
    %c0_7 = arith.constant 0 : index
    %25 = vector.load %arg4[%c0_6, %c0_7] : memref<8x128xf32, #tpu.memory_space<vmem>>, vector<8x128xf32>
    %26 = vector.extract_strided_slice %25 {offsets = [0, 0], sizes = [1, 128], strides = [1, 1]} : vector<8x128xf32> to vector<1x128xf32>
    %27 = vector.extract_strided_slice %25 {offsets = [1, 0], sizes = [1, 128], strides = [1, 1]} : vector<8x128xf32> to vector<1x128xf32>
    %28 = vector.extract_strided_slice %25 {offsets = [2, 0], sizes = [1, 128], strides = [1, 1]} : vector<8x128xf32> to vector<1x128xf32>
    %29 = vector.extract_strided_slice %25 {offsets = [3, 0], sizes = [1, 128], strides = [1, 1]} : vector<8x128xf32> to vector<1x128xf32>
    %30 = vector.extract_strided_slice %25 {offsets = [4, 0], sizes = [1, 128], strides = [1, 1]} : vector<8x128xf32> to vector<1x128xf32>
    %31 = vector.extract_strided_slice %25 {offsets = [5, 0], sizes = [1, 128], strides = [1, 1]} : vector<8x128xf32> to vector<1x128xf32>
    %32 = arith.truncf %3 : vector<16x4xf32> to vector<16x4xbf16>
    %c0_8 = arith.constant 0 : index
    %c0_9 = arith.constant 0 : index
    %33 = vector.load %arg2[%c0_8, %c0_9] : memref<4x384xbf16, #tpu.memory_space<vmem>>, vector<4x384xbf16>
    %cst_10 = arith.constant dense<0.000000e+00> : vector<16x384xf32>
    %34 = tpu.matmul %32, %33, %cst_10 {dimension_numbers = #tpu.dot_dimension_numbers<[1], [0], [0], [1], [0, 0, 1, 1], [], []>} : vector<16x4xbf16>, vector<4x384xbf16>, vector<16x384xf32> -> vector<16x384xf32>
    %35 = vector.extract_strided_slice %34 {offsets = [0, 0], sizes = [16, 128], strides = [1, 1]} : vector<16x384xf32> to vector<16x128xf32>
    %36 = vector.extract_strided_slice %34 {offsets = [0, 128], sizes = [16, 128], strides = [1, 1]} : vector<16x384xf32> to vector<16x128xf32>
    %37 = vector.extract_strided_slice %34 {offsets = [0, 256], sizes = [16, 128], strides = [1, 1]} : vector<16x384xf32> to vector<16x128xf32>
    %38 = vector.broadcast %26 : vector<1x128xf32> to vector<16x128xf32>
    %39 = arith.addf %36, %38 : vector<16x128xf32>
    %c1_i32_11 = arith.constant 1 : i32
    %40 = tpu.dynamic_rotate %35 by %c1_i32_11 dim 0 : vector<16x128xf32>, i32 -> vector<16x128xf32>
    %cst_12 = arith.constant 0.000000e+00 : f32
    %41 = vector.shape_cast %22 : vector<16x1xi1> to vector<16x1xi1>
    %42 = vector.broadcast %41 : vector<16x1xi1> to vector<16x128xi1>
    %43 = vector.broadcast %cst_12 : f32 to vector<16x128xf32>
    %44 = arith.select %42, %40, %43 : vector<16x128xi1>, vector<16x128xf32>
    %45 = arith.addf %39, %44 : vector<16x128xf32>
    %c15_i32 = arith.constant 15 : i32
    %46 = tpu.dynamic_rotate %37 by %c15_i32 dim 0 : vector<16x128xf32>, i32 -> vector<16x128xf32>
    %cst_13 = arith.constant 0.000000e+00 : f32
    %47 = vector.shape_cast %24 : vector<16x1xi1> to vector<16x1xi1>
    %48 = vector.broadcast %47 : vector<16x1xi1> to vector<16x128xi1>
    %49 = vector.broadcast %cst_13 : f32 to vector<16x128xf32>
    %50 = arith.select %48, %46, %49 : vector<16x128xi1>, vector<16x128xf32>
    %51 = arith.addf %45, %50 : vector<16x128xf32>
    %52 = vector.shape_cast %51 : vector<16x128xf32> to vector<2x8x128xf32>
    %cst_14 = arith.constant dense<0.000000e+00> : vector<2x128xf32>
    %53 = vector.multi_reduction <add>, %52, %cst_14 [1] : vector<2x8x128xf32> to vector<2x128xf32>
    %54 = vector.shape_cast %53 : vector<2x128xf32> to vector<2x1x128xf32>
    %cst_15 = arith.constant dense<0.000000e+00> : vector<2x1xf32>
    %55 = vector.multi_reduction <add>, %54, %cst_15 [2] : vector<2x1x128xf32> to vector<2x1xf32>
    %56 = vector.shape_cast %55 : vector<2x1xf32> to vector<2x1x1xf32>
    %57 = arith.mulf %52, %52 : vector<2x8x128xf32>
    %cst_16 = arith.constant dense<0.000000e+00> : vector<2x128xf32>
    %58 = vector.multi_reduction <add>, %57, %cst_16 [1] : vector<2x8x128xf32> to vector<2x128xf32>
    %59 = vector.shape_cast %58 : vector<2x128xf32> to vector<2x1x128xf32>
    %cst_17 = arith.constant dense<0.000000e+00> : vector<2x1xf32>
    %60 = vector.multi_reduction <add>, %59, %cst_17 [2] : vector<2x1x128xf32> to vector<2x1xf32>
    %61 = vector.shape_cast %60 : vector<2x1xf32> to vector<2x1x1xf32>
    %cst_18 = arith.constant 1.562500e-02 : f32
    %62 = vector.broadcast %cst_18 : f32 to vector<2x1x1xf32>
    %63 = arith.mulf %56, %62 : vector<2x1x1xf32>
    %cst_19 = arith.constant 1.562500e-02 : f32
    %64 = vector.broadcast %cst_19 : f32 to vector<2x1x1xf32>
    %65 = arith.mulf %61, %64 : vector<2x1x1xf32>
    %66 = arith.mulf %63, %63 : vector<2x1x1xf32>
    %67 = arith.subf %65, %66 : vector<2x1x1xf32>
    %cst_20 = arith.constant 0.000000e+00 : f32
    %68 = vector.broadcast %cst_20 : f32 to vector<2x1x1xf32>
    %69 = arith.maximumf %67, %68 : vector<2x1x1xf32>
    %70 = vector.broadcast %63 : vector<2x1x1xf32> to vector<2x8x128xf32>
    %71 = arith.subf %52, %70 : vector<2x8x128xf32>
    %cst_21 = arith.constant 9.99999974E-6 : f32
    %72 = vector.broadcast %cst_21 : f32 to vector<2x1x1xf32>
    %73 = arith.addf %69, %72 : vector<2x1x1xf32>
    %74 = math.rsqrt %73 : vector<2x1x1xf32>
    %75 = vector.broadcast %74 : vector<2x1x1xf32> to vector<2x8x128xf32>
    %76 = arith.mulf %71, %75 : vector<2x8x128xf32>
    %77 = vector.shape_cast %27 : vector<1x128xf32> to vector<1x1x128xf32>
    %78 = vector.broadcast %77 : vector<1x1x128xf32> to vector<2x8x128xf32>
    %79 = arith.mulf %76, %78 : vector<2x8x128xf32>
    %80 = vector.shape_cast %28 : vector<1x128xf32> to vector<1x1x128xf32>
    %81 = vector.broadcast %80 : vector<1x1x128xf32> to vector<2x8x128xf32>
    %82 = arith.addf %79, %81 : vector<2x8x128xf32>
    %cst_22 = arith.constant 5.000000e-01 : f32
    %83 = vector.broadcast %cst_22 : f32 to vector<2x8x128xf32>
    %84 = arith.mulf %83, %82 : vector<2x8x128xf32>
    %cst_23 = arith.constant 0.707106769 : f32
    %85 = vector.broadcast %cst_23 : f32 to vector<2x8x128xf32>
    %86 = arith.mulf %82, %85 : vector<2x8x128xf32>
    %87 = math.erf %86 : vector<2x8x128xf32>
    %cst_24 = arith.constant 1.000000e+00 : f32
    %88 = vector.broadcast %cst_24 : f32 to vector<2x8x128xf32>
    %89 = arith.addf %88, %87 : vector<2x8x128xf32>
    %90 = arith.mulf %84, %89 : vector<2x8x128xf32>
    %91 = vector.shape_cast %90 : vector<2x8x128xf32> to vector<16x128xf32>
    %92 = arith.truncf %91 : vector<16x128xf32> to vector<16x128xbf16>
    %c0_25 = arith.constant 0 : index
    %c0_26 = arith.constant 0 : index
    %93 = vector.load %arg3[%c0_25, %c0_26] : memref<128x384xbf16, #tpu.memory_space<vmem>>, vector<128x384xbf16>
    %cst_27 = arith.constant dense<0.000000e+00> : vector<16x384xf32>
    %94 = tpu.matmul %92, %93, %cst_27 {dimension_numbers = #tpu.dot_dimension_numbers<[1], [0], [0], [1], [0, 0, 1, 1], [], []>} : vector<16x128xbf16>, vector<128x384xbf16>, vector<16x384xf32> -> vector<16x384xf32>
    %95 = vector.extract_strided_slice %94 {offsets = [0, 0], sizes = [16, 128], strides = [1, 1]} : vector<16x384xf32> to vector<16x128xf32>
    %96 = vector.extract_strided_slice %94 {offsets = [0, 128], sizes = [16, 128], strides = [1, 1]} : vector<16x384xf32> to vector<16x128xf32>
    %97 = vector.extract_strided_slice %94 {offsets = [0, 256], sizes = [16, 128], strides = [1, 1]} : vector<16x384xf32> to vector<16x128xf32>
    %98 = vector.broadcast %29 : vector<1x128xf32> to vector<16x128xf32>
    %99 = arith.addf %96, %98 : vector<16x128xf32>
    %c1_i32_28 = arith.constant 1 : i32
    %100 = tpu.dynamic_rotate %95 by %c1_i32_28 dim 0 : vector<16x128xf32>, i32 -> vector<16x128xf32>
    %cst_29 = arith.constant 0.000000e+00 : f32
    %101 = vector.shape_cast %22 : vector<16x1xi1> to vector<16x1xi1>
    %102 = vector.broadcast %101 : vector<16x1xi1> to vector<16x128xi1>
    %103 = vector.broadcast %cst_29 : f32 to vector<16x128xf32>
    %104 = arith.select %102, %100, %103 : vector<16x128xi1>, vector<16x128xf32>
    %105 = arith.addf %99, %104 : vector<16x128xf32>
    %c15_i32_30 = arith.constant 15 : i32
    %106 = tpu.dynamic_rotate %97 by %c15_i32_30 dim 0 : vector<16x128xf32>, i32 -> vector<16x128xf32>
    %cst_31 = arith.constant 0.000000e+00 : f32
    %107 = vector.shape_cast %24 : vector<16x1xi1> to vector<16x1xi1>
    %108 = vector.broadcast %107 : vector<16x1xi1> to vector<16x128xi1>
    %109 = vector.broadcast %cst_31 : f32 to vector<16x128xf32>
    %110 = arith.select %108, %106, %109 : vector<16x128xi1>, vector<16x128xf32>
    %111 = arith.addf %105, %110 : vector<16x128xf32>
    %112 = vector.shape_cast %111 : vector<16x128xf32> to vector<2x8x128xf32>
    %cst_32 = arith.constant dense<0.000000e+00> : vector<2x128xf32>
    %113 = vector.multi_reduction <add>, %112, %cst_32 [1] : vector<2x8x128xf32> to vector<2x128xf32>
    %114 = vector.shape_cast %113 : vector<2x128xf32> to vector<2x1x128xf32>
    %cst_33 = arith.constant dense<0.000000e+00> : vector<2x1xf32>
    %115 = vector.multi_reduction <add>, %114, %cst_33 [2] : vector<2x1x128xf32> to vector<2x1xf32>
    %116 = vector.shape_cast %115 : vector<2x1xf32> to vector<2x1x1xf32>
    %117 = arith.mulf %112, %112 : vector<2x8x128xf32>
    %cst_34 = arith.constant dense<0.000000e+00> : vector<2x128xf32>
    %118 = vector.multi_reduction <add>, %117, %cst_34 [1] : vector<2x8x128xf32> to vector<2x128xf32>
    %119 = vector.shape_cast %118 : vector<2x128xf32> to vector<2x1x128xf32>
    %cst_35 = arith.constant dense<0.000000e+00> : vector<2x1xf32>
    %120 = vector.multi_reduction <add>, %119, %cst_35 [2] : vector<2x1x128xf32> to vector<2x1xf32>
    %121 = vector.shape_cast %120 : vector<2x1xf32> to vector<2x1x1xf32>
    %cst_36 = arith.constant 1.562500e-02 : f32
    %122 = vector.broadcast %cst_36 : f32 to vector<2x1x1xf32>
    %123 = arith.mulf %116, %122 : vector<2x1x1xf32>
    %cst_37 = arith.constant 1.562500e-02 : f32
    %124 = vector.broadcast %cst_37 : f32 to vector<2x1x1xf32>
    %125 = arith.mulf %121, %124 : vector<2x1x1xf32>
    %126 = arith.mulf %123, %123 : vector<2x1x1xf32>
    %127 = arith.subf %125, %126 : vector<2x1x1xf32>
    %cst_38 = arith.constant 0.000000e+00 : f32
    %128 = vector.broadcast %cst_38 : f32 to vector<2x1x1xf32>
    %129 = arith.maximumf %127, %128 : vector<2x1x1xf32>
    %130 = vector.broadcast %123 : vector<2x1x1xf32> to vector<2x8x128xf32>
    %131 = arith.subf %112, %130 : vector<2x8x128xf32>
    %cst_39 = arith.constant 9.99999974E-6 : f32
    %132 = vector.broadcast %cst_39 : f32 to vector<2x1x1xf32>
    %133 = arith.addf %129, %132 : vector<2x1x1xf32>
    %134 = math.rsqrt %133 : vector<2x1x1xf32>
    %135 = vector.broadcast %134 : vector<2x1x1xf32> to vector<2x8x128xf32>
    %136 = arith.mulf %131, %135 : vector<2x8x128xf32>
    %137 = vector.shape_cast %30 : vector<1x128xf32> to vector<1x1x128xf32>
    %138 = vector.broadcast %137 : vector<1x1x128xf32> to vector<2x8x128xf32>
    %139 = arith.mulf %136, %138 : vector<2x8x128xf32>
    %140 = vector.shape_cast %31 : vector<1x128xf32> to vector<1x1x128xf32>
    %141 = vector.broadcast %140 : vector<1x1x128xf32> to vector<2x8x128xf32>
    %142 = arith.addf %139, %141 : vector<2x8x128xf32>
    %cst_40 = arith.constant 5.000000e-01 : f32
    %143 = vector.broadcast %cst_40 : f32 to vector<2x8x128xf32>
    %144 = arith.mulf %143, %142 : vector<2x8x128xf32>
    %cst_41 = arith.constant 0.707106769 : f32
    %145 = vector.broadcast %cst_41 : f32 to vector<2x8x128xf32>
    %146 = arith.mulf %142, %145 : vector<2x8x128xf32>
    %147 = math.erf %146 : vector<2x8x128xf32>
    %cst_42 = arith.constant 1.000000e+00 : f32
    %148 = vector.broadcast %cst_42 : f32 to vector<2x8x128xf32>
    %149 = arith.addf %148, %147 : vector<2x8x128xf32>
    %150 = arith.mulf %144, %149 : vector<2x8x128xf32>
    %151 = vector.shape_cast %150 : vector<2x8x128xf32> to vector<16x128xf32>
    %152 = vector.shape_cast %151 : vector<16x128xf32> to vector<2x8x128xf32>
    %153 = vector.extract_strided_slice %152 {offsets = [0, 0, 0], sizes = [2, 8, 8], strides = [1, 1, 1]} : vector<2x8x128xf32> to vector<2x8x8xf32>
    %154 = tpu.transpose %153, [0, 2, 1] : vector<2x8x8xf32> -> vector<2x8x8xf32>
    %c0_43 = arith.constant 0 : index
    %c0_44 = arith.constant 0 : index
    %c0_45 = arith.constant 0 : index
    %155 = vector.load %arg5[%c0_43, %c0_44, %c0_45] : memref<2x8x8xf32, #tpu.memory_space<vmem>>, vector<2x8x8xf32>
    tpu.vector_store %arg5[%c0_43, %c0_44, %c0_45], %154 {strides = array<i32>} : memref<2x8x8xf32, #tpu.memory_space<vmem>>, vector<2x8x8xf32>,
    return
  }
  func.func @transform_0(%arg0: i32) -> (i32, i32, i32) {
    %c0_i32 = arith.constant 0 : i32
    %c0_i32_0 = arith.constant 0 : i32
    %c0_i32_1 = arith.constant 0 : i32
    return %arg0, %c0_i32, %c0_i32_0 : i32, i32, i32
  }
  func.func @transform_1(%arg0: i32) -> (i32, i32) {
    %c0_i32 = arith.constant 0 : i32
    %c0_i32_0 = arith.constant 0 : i32
    %c0_i32_1 = arith.constant 0 : i32
    return %c0_i32, %c0_i32_0 : i32, i32
  }
  func.func @transform_2(%arg0: i32) -> (i32, i32) {
    %c0_i32 = arith.constant 0 : i32
    %c0_i32_0 = arith.constant 0 : i32
    %c0_i32_1 = arith.constant 0 : i32
    return %c0_i32, %c0_i32_0 : i32, i32
  }
  func.func @transform_3(%arg0: i32) -> (i32, i32) {
    %c0_i32 = arith.constant 0 : i32
    %c0_i32_0 = arith.constant 0 : i32
    %c0_i32_1 = arith.constant 0 : i32
    return %c0_i32, %c0_i32_0 : i32, i32
  }
  func.func @transform_4(%arg0: i32) -> (i32, i32, i32) {
    %c0_i32 = arith.constant 0 : i32
    %c0_i32_0 = arith.constant 0 : i32
    %c0_i32_1 = arith.constant 0 : i32
    return %arg0, %c0_i32, %c0_i32_0 : i32, i32, i32
  }
}

</mosaic_0001>

<llo_original>
// kernel: tpu_custom_call.1
$region0: #{tpu_custom_call.1}
  #allocation0 [shape = 'u32[]', space=smem, size = 0x4, offset = 0x4, fixed_abs, tag = 'smem constant byte address 0x4 - core index']
  #allocation1 [shape = 'u32[144,128]{1,0:T(1,128)}', space=vmem, size = 0x12000, scoped, tag = 'internal scratch']
  %s0 = inlined_call_operand.hbm [shape: f32[2,4,16], index: 0, kind: input, shape index: {}]
  %s1 = inlined_call_operand.hbm [shape: bf16[4,384], index: 1, kind: input, shape index: {}]
  %s2 = inlined_call_operand.hbm [shape: bf16[128,384], index: 2, kind: input, shape index: {}]
  %s3 = inlined_call_operand.vmem [shape: f32[8,128], index: 3, kind: input, shape index: {}]
  %s4 = inlined_call_operand.hbm [shape: f32[2,8,8], index: 4, kind: output, shape index: {}]
  %s5 = sld [smem:[#allocation0]]
  $region38: #{tpu_custom_call.1} parent=0
    _
  %s7 = ssub.s32 1, %s5
  %s8 = scalar_select 0, %s7, %s5
  $region1: #{tpu_custom_call.1} parent=0
    #allocation2 [shape = 'u8[4096]{0}', space=vmem, size = 0x1000, scoped, tag = 'input window, operand 0, single buffered']
    #allocation3 [shape = 's32[1]{0}', space=sflag, size = 0x4, scoped, tag = 'scoped memory for tpu_custom_call.1']
    #allocation4 [shape = 's32[1]{0}', space=sflag, size = 0x4, scoped, tag = 'scoped memory for tpu_custom_call.1']
    #allocation5 [shape = 'u8[3072]{0}', space=vmem, size = 0xc00, scoped, tag = 'input window, operand 1, single buffered']
    #allocation6 [shape = 's32[1]{0}', space=sflag, size = 0x4, scoped, tag = 'scoped memory for tpu_custom_call.1']
    #allocation7 [shape = 'u8[98304]{0}', space=vmem, size = 0x18000, scoped, tag = 'input window, operand 2, single buffered']
    #allocation8 [shape = 'u8[8192]{0}', space=vmem, size = 0x2000, scoped, tag = 'output window, operand 0, single buffered']
    %9 = vsyncpa [#allocation3], 0
    %10 = vsyncpa [#allocation6], 0
    %11 = vsyncpa [#allocation4], 0
    // Predicated region
    $region2: #{tpu_custom_call.1} parent=1 // pred_check
      _
    $region3: #{tpu_custom_call.1} parent=1 // pred_check_branch
      %13 = sbr.rel (0) target = $region5
    $region4: #{tpu_custom_call.1} parent=1 // pred_region
      %s15 = ssub.s32 128, 128
      %16 = vsyncadd [#allocation3], %s15
      %s17 = sshll.u32 [#allocation2], 4
      %s18 = int_to_ptr.vmem [resolvable:$true] %s17
      %23 = dma.hbm_to_vmem [thread:$0]  %s0, 128, %s18, [#allocation3], 64, 64, 4
    $region5: #{tpu_custom_call.1} parent=1 // pred_fallthru
      _
    // Predicated region
    $region6: #{tpu_custom_call.1} parent=1 // pred_check
      _
    $region7: #{tpu_custom_call.1} parent=1 // pred_check_branch
      %25 = sbr.rel (0) target = $region9
    $region8: #{tpu_custom_call.1} parent=1 // pred_region
      %s27 = ssub.s32 96, 96
      %28 = vsyncadd [#allocation6], %s27
      %s30 = sshll.u32 [#allocation5], 4
      %s31 = int_to_ptr.vmem [resolvable:$true] %s30
      %33 = dma.hbm_to_vmem [thread:$0]  %s1, 96, %s31, [#allocation6]
    $region9: #{tpu_custom_call.1} parent=1 // pred_fallthru
      _
    // Predicated region
    $region10: #{tpu_custom_call.1} parent=1 // pred_check
      _
    $region11: #{tpu_custom_call.1} parent=1 // pred_check_branch
      %35 = sbr.rel (0) target = $region13
    $region12: #{tpu_custom_call.1} parent=1 // pred_region
      %s37 = ssub.s32 3072, 3072
      %38 = vsyncadd [#allocation6], %s37
      %s39 = sshll.u32 [#allocation7], 4
      %s40 = int_to_ptr.vmem [resolvable:$true] %s39
      %45 = dma.hbm_to_vmem [thread:$0]  %s2, 3072, %s40, [#allocation6], 192, 192, 12
    $region13: #{tpu_custom_call.1} parent=1 // pred_fallthru
      _
    // Predicated region
    $region14: #{tpu_custom_call.1} parent=1 // pred_check
      _
    $region15: #{tpu_custom_call.1} parent=1 // pred_check_branch
      %47 = sbr.rel (0) target = $region17
    $region16: #{tpu_custom_call.1} parent=1 // pred_region
      _
    $region17: #{tpu_custom_call.1} parent=1 // pred_fallthru
      _
    // Predicated region
    $region18: #{tpu_custom_call.1} parent=1 // pred_check
      _
    $region19: #{tpu_custom_call.1} parent=1 // pred_check_branch
      %49 = sbr.rel (0) target = $region21
    $region20: #{tpu_custom_call.1} parent=1 // pred_region
      %50 = dma.done [#allocation3], 128
    $region21: #{tpu_custom_call.1} parent=1 // pred_fallthru
      _
    // Predicated region
    $region22: #{tpu_custom_call.1} parent=1 // pred_check
      _
    $region23: #{tpu_custom_call.1} parent=1 // pred_check_branch
      %52 = sbr.rel (0) target = $region25
    $region24: #{tpu_custom_call.1} parent=1 // pred_region
      %53 = dma.done [#allocation6], 96
    $region25: #{tpu_custom_call.1} parent=1 // pred_fallthru
      _
    // Predicated region
    $region26: #{tpu_custom_call.1} parent=1 // pred_check
      _
    $region27: #{tpu_custom_call.1} parent=1 // pred_check_branch
      %55 = sbr.rel (0) target = $region29
    $region28: #{tpu_custom_call.1} parent=1 // pred_region
      %56 = dma.done [#allocation6], 3072
    $region29: #{tpu_custom_call.1} parent=1 // pred_fallthru
      _
    %v58 = vld [vmem:[#allocation2] sm:$0xf]
    %v59 = vld [vmem:[#allocation2 + $0x4] sm:$0xf]
    %60 = vxpose.xlu0.b32.start [1/16] %v58, 128
    %61 = vxpose.xlu0.b32.cont [2/16] 0.0, 128
    %62 = vxpose.xlu0.b32.cont [3/16] 0.0, 128
    %63 = vxpose.xlu0.b32.cont [4/16] 0.0, 128
    %64 = vxpose.xlu0.b32.cont [5/16] 0.0, 128
    %65 = vxpose.xlu0.b32.cont [6/16] 0.0, 128
    %66 = vxpose.xlu0.b32.cont [7/16] 0.0, 128
    %67 = vxpose.xlu0.b32.cont [8/16] 0.0, 128
    %68 = vxpose.xlu0.b32.cont [9/16] 0.0, 128
    %69 = vxpose.xlu0.b32.cont [10/16] 0.0, 128
    %70 = vxpose.xlu0.b32.cont [11/16] 0.0, 128
    %71 = vxpose.xlu0.b32.cont [12/16] 0.0, 128
    %72 = vxpose.xlu0.b32.cont [13/16] 0.0, 128
    %73 = vxpose.xlu0.b32.cont [14/16] 0.0, 128
    %74 = vxpose.xlu0.b32.cont [15/16] 0.0, 128
    %75 = vxpose.xlu0.b32.end [16/16] 0.0, 128
    %v76 = vpop.trf.xlu0
    %v77 = vpop.trf.xlu0
    %v78 = vpop.trf.xlu0
    %v79 = vpop.trf.xlu0
    %v80 = vpop.trf.xlu0
    %v81 = vpop.trf.xlu0
    %v82 = vpop.trf.xlu0
    %v83 = vpop.trf.xlu0
    %v84 = vpop.trf.xlu0
    %v85 = vpop.trf.xlu0
    %v86 = vpop.trf.xlu0
    %v87 = vpop.trf.xlu0
    %v88 = vpop.trf.xlu0
    %v89 = vpop.trf.xlu0
    %v90 = vpop.trf.xlu0
    %v91 = vpop.trf.xlu0
    %92 = vxpose.xlu0.b32.start [1/16] %v59, 128
    %93 = vxpose.xlu0.b32.cont [2/16] 0.0, 128
    %94 = vxpose.xlu0.b32.cont [3/16] 0.0, 128
    %95 = vxpose.xlu0.b32.cont [4/16] 0.0, 128
    %96 = vxpose.xlu0.b32.cont [5/16] 0.0, 128
    %97 = vxpose.xlu0.b32.cont [6/16] 0.0, 128
    %98 = vxpose.xlu0.b32.cont [7/16] 0.0, 128
    %99 = vxpose.xlu0.b32.cont [8/16] 0.0, 128
    %100 = vxpose.xlu0.b32.cont [9/16] 0.0, 128
    %101 = vxpose.xlu0.b32.cont [10/16] 0.0, 128
    %102 = vxpose.xlu0.b32.cont [11/16] 0.0, 128
    %103 = vxpose.xlu0.b32.cont [12/16] 0.0, 128
    %104 = vxpose.xlu0.b32.cont [13/16] 0.0, 128
    %105 = vxpose.xlu0.b32.cont [14/16] 0.0, 128
    %106 = vxpose.xlu0.b32.cont [15/16] 0.0, 128
    %107 = vxpose.xlu0.b32.end [16/16] 0.0, 128
    %v108 = vpop.trf.xlu0
    %v109 = vpop.trf.xlu0
    %v110 = vpop.trf.xlu0
    %v111 = vpop.trf.xlu0
    %v112 = vpop.trf.xlu0
    %v113 = vpop.trf.xlu0
    %v114 = vpop.trf.xlu0
    %v115 = vpop.trf.xlu0
    %v116 = vpop.trf.xlu0
    %v117 = vpop.trf.xlu0
    %v118 = vpop.trf.xlu0
    %v119 = vpop.trf.xlu0
    %v120 = vpop.trf.xlu0
    %v121 = vpop.trf.xlu0
    %v122 = vpop.trf.xlu0
    %v123 = vpop.trf.xlu0
    %v128 = vcombine.high %v76, %v76
    %v130 = vunpack.c.l.s4 1983009808
    %v131 = vunpack.c.0.s8 %v130
    %v132 = vlaneseq
    %v133 = vshrl.u32 %v132, 7
    %v134 = vsub.s32 %v131, %v133
    %v135 = vrot.slane %v76, %v134
    %v137 = vunpack.c.l.s4 1983009808
    %v138 = vunpack.c.0.s8 %v137
    %v139 = vlaneseq
    %v140 = vshrl.u32 %v139, 7
    %v141 = vsub.s32 %v138, %v140
    %v142 = vrot.slane %v128, %v141
    %v143 = vcombine.high %v135, %v135
    %v144 = vcombine.high %v142, %v142
    %v145 = vcombine.high %v77, %v77
    %v147 = vunpack.c.l.s4 1983009808
    %v148 = vunpack.c.0.s8 %v147
    %v149 = vlaneseq
    %v150 = vshrl.u32 %v149, 7
    %v151 = vsub.s32 %v148, %v150
    %v152 = vrot.slane %v77, %v151
    %v154 = vunpack.c.l.s4 1983009808
    %v155 = vunpack.c.0.s8 %v154
    %v156 = vlaneseq
    %v157 = vshrl.u32 %v156, 7
    %v158 = vsub.s32 %v155, %v157
    %v159 = vrot.slane %v145, %v158
    %v160 = vcombine.high %v152, %v152
    %v161 = vcombine.high %v159, %v159
    %v162 = vcombine.high %v108, %v108
    %v164 = vunpack.c.l.s4 1983009808
    %v165 = vunpack.c.0.s8 %v164
    %v166 = vlaneseq
    %v167 = vshrl.u32 %v166, 7
    %v168 = vsub.s32 %v165, %v167
    %v169 = vrot.slane %v108, %v168
    %v171 = vunpack.c.l.s4 1983009808
    %v172 = vunpack.c.0.s8 %v171
    %v173 = vlaneseq
    %v174 = vshrl.u32 %v173, 7
    %v175 = vsub.s32 %v172, %v174
    %v176 = vrot.slane %v162, %v175
    %v177 = vcombine.high %v169, %v169
    %v178 = vcombine.high %v176, %v176
    %v179 = vcombine.high %v109, %v109
    %v181 = vunpack.c.l.s4 1983009808
    %v182 = vunpack.c.0.s8 %v181
    %v183 = vlaneseq
    %v184 = vshrl.u32 %v183, 7
    %v185 = vsub.s32 %v182, %v184
    %v186 = vrot.slane %v109, %v185
    %v188 = vunpack.c.l.s4 1983009808
    %v189 = vunpack.c.0.s8 %v188
    %v190 = vlaneseq
    %v191 = vshrl.u32 %v190, 7
    %v192 = vsub.s32 %v189, %v191
    %v193 = vrot.slane %v179, %v192
    %v194 = vcombine.high %v186, %v186
    %v195 = vcombine.high %v193, %v193
    %vm212 = vcmask 25600
    %v213 = vsel %vm212, %v135, -inf
    %v214 = vrot.slane %v213, 4
    %v215 = vmax.f32 %v213, %v214
    %v216 = vrot.slane %v215, 2
    %v217 = vmax.f32 %v215, %v216
    %v218 = vrot.slane %v217, 1
    %v219 = vmax.f32 %v217, %v218
    %v220 = vsel %vm212, %v143, -inf
    %v221 = vrot.slane %v220, 4
    %v222 = vmax.f32 %v220, %v221
    %v223 = vrot.slane %v222, 2
    %v224 = vmax.f32 %v222, %v223
    %v225 = vrot.slane %v224, 1
    %v226 = vmax.f32 %v224, %v225
    %v227 = vsel %vm212, %v142, -inf
    %v228 = vrot.slane %v227, 4
    %v229 = vmax.f32 %v227, %v228
    %v230 = vrot.slane %v229, 2
    %v231 = vmax.f32 %v229, %v230
    %v232 = vrot.slane %v231, 1
    %v233 = vmax.f32 %v231, %v232
    %v234 = vsel %vm212, %v144, -inf
    %v235 = vrot.slane %v234, 4
    %v236 = vmax.f32 %v234, %v235
    %v237 = vrot.slane %v236, 2
    %v238 = vmax.f32 %v236, %v237
    %v239 = vrot.slane %v238, 1
    %v240 = vmax.f32 %v238, %v239
    %v241 = vsel %vm212, %v152, -inf
    %v242 = vrot.slane %v241, 4
    %v243 = vmax.f32 %v241, %v242
    %v244 = vrot.slane %v243, 2
    %v245 = vmax.f32 %v243, %v244
    %v246 = vrot.slane %v245, 1
    %v247 = vmax.f32 %v245, %v246
    %v248 = vsel %vm212, %v160, -inf
    %v249 = vrot.slane %v248, 4
    %v250 = vmax.f32 %v248, %v249
    %v251 = vrot.slane %v250, 2
    %v252 = vmax.f32 %v250, %v251
    %v253 = vrot.slane %v252, 1
    %v254 = vmax.f32 %v252, %v253
    %v255 = vsel %vm212, %v159, -inf
    %v256 = vrot.slane %v255, 4
    %v257 = vmax.f32 %v255, %v256
    %v258 = vrot.slane %v257, 2
    %v259 = vmax.f32 %v257, %v258
    %v260 = vrot.slane %v259, 1
    %v261 = vmax.f32 %v259, %v260
    %v262 = vsel %vm212, %v161, -inf
    %v263 = vrot.slane %v262, 4
    %v264 = vmax.f32 %v262, %v263
    %v265 = vrot.slane %v264, 2
    %v266 = vmax.f32 %v264, %v265
    %v267 = vrot.slane %v266, 1
    %v268 = vmax.f32 %v266, %v267
    %v269 = vsel %vm212, %v169, -inf
    %v270 = vrot.slane %v269, 4
    %v271 = vmax.f32 %v269, %v270
    %v272 = vrot.slane %v271, 2
    %v273 = vmax.f32 %v271, %v272
    %v274 = vrot.slane %v273, 1
    %v275 = vmax.f32 %v273, %v274
    %v276 = vsel %vm212, %v177, -inf
    %v277 = vrot.slane %v276, 4
    %v278 = vmax.f32 %v276, %v277
    %v279 = vrot.slane %v278, 2
    %v280 = vmax.f32 %v278, %v279
    %v281 = vrot.slane %v280, 1
    %v282 = vmax.f32 %v280, %v281
    %v283 = vsel %vm212, %v176, -inf
    %v284 = vrot.slane %v283, 4
    %v285 = vmax.f32 %v283, %v284
    %v286 = vrot.slane %v285, 2
    %v287 = vmax.f32 %v285, %v286
    %v288 = vrot.slane %v287, 1
    %v289 = vmax.f32 %v287, %v288
    %v290 = vsel %vm212, %v178, -inf
    %v291 = vrot.slane %v290, 4
    %v292 = vmax.f32 %v290, %v291
    %v293 = vrot.slane %v292, 2
    %v294 = vmax.f32 %v292, %v293
    %v295 = vrot.slane %v294, 1
    %v296 = vmax.f32 %v294, %v295
    %v297 = vsel %vm212, %v186, -inf
    %v298 = vrot.slane %v297, 4
    %v299 = vmax.f32 %v297, %v298
    %v300 = vrot.slane %v299, 2
    %v301 = vmax.f32 %v299, %v300
    %v302 = vrot.slane %v301, 1
    %v303 = vmax.f32 %v301, %v302
    %v304 = vsel %vm212, %v194, -inf
    %v305 = vrot.slane %v304, 4
    %v306 = vmax.f32 %v304, %v305
    %v307 = vrot.slane %v306, 2
    %v308 = vmax.f32 %v306, %v307
    %v309 = vrot.slane %v308, 1
    %v310 = vmax.f32 %v308, %v309
    %v311 = vsel %vm212, %v193, -inf
    %v312 = vrot.slane %v311, 4
    %v313 = vmax.f32 %v311, %v312
    %v314 = vrot.slane %v313, 2
    %v315 = vmax.f32 %v313, %v314
    %v316 = vrot.slane %v315, 1
    %v317 = vmax.f32 %v315, %v316
    %v318 = vsel %vm212, %v195, -inf
    %v319 = vrot.slane %v318, 4
    %v320 = vmax.f32 %v318, %v319
    %v321 = vrot.slane %v320, 2
    %v322 = vmax.f32 %v320, %v321
    %v323 = vrot.slane %v322, 1
    %v324 = vmax.f32 %v322, %v323
    %v325 = vlaneseq
    %v326 = vshrl.u32 %v325, 7
    %v327 = vadd.s32 %v326, 8
    %vm328 = vcmp.lt.s32.totalorder %v326, 0
    %v329 = vsub.s32 0, %v326
    %v330 = vsel %vm328, %v329, %v326
    %v331 = vshrl.u32 %v330, 3
    %v332 = vand.u32 %v330, 7
    %v333 = vsub.s32 0, %v332
    %v334 = vsel %vm328, %v333, %v332
    %vm335 = vcmp.lt.s32.totalorder %v327, 0
    %v336 = vsub.s32 0, %v327
    %v337 = vsel %vm335, %v336, %v327
    %v338 = vshrl.u32 %v337, 3
    %v339 = vand.u32 %v337, 7
    %v340 = vsub.s32 0, %v339
    %v341 = vsel %vm335, %v340, %v339
    %vm342 = vcmp.ne.s32.totalorder %v334, 0
    %vm343 = vcmp.ne.s32.totalorder %v341, 0
    %vm344 = vcmp.lt.s32.totalorder %v334, 0
    %vm345 = vcmp.lt.s32.totalorder %v341, 0
    %vm346 = vmand %vm344, %vm342
    %vm347 = vmand %vm345, %vm343
    %v348 = vadd.s32 %v334, 8
    %v349 = vadd.s32 %v341, 8
    %v350 = vsel %vm346, %v348, %v334
    %v351 = vsel %vm347, %v349, %v341
    %vm352 = vcmp.ne.s32.totalorder %v350, 0
    %vm353 = vcmp.ne.s32.totalorder %v351, 0
    %vm354 = vcmp.ne.s32.totalorder %v350, 7
    %vm355 = vcmp.ne.s32.totalorder %v351, 7
    %v356 = vld [vmem:[%s3] sm:$0xff]
    %v357 = vpack.c.bf16 %v219, %v219
    %v358 = vpack.c.bf16 %v226, %v226
    %v359 = vpack.c.bf16 %v233, %v233
    %v360 = vpack.c.bf16 %v240, %v240
    %v361 = vpack.c.bf16 %v247, %v247
    %v362 = vpack.c.bf16 %v254, %v254
    %v363 = vpack.c.bf16 %v261, %v261
    %v364 = vpack.c.bf16 %v268, %v268
    %v365 = vpack.c.bf16 %v275, %v275
    %v366 = vpack.c.bf16 %v282, %v282
    %v367 = vpack.c.bf16 %v289, %v289
    %v368 = vpack.c.bf16 %v296, %v296
    %v369 = vpack.c.bf16 %v303, %v303
    %v370 = vpack.c.bf16 %v310, %v310
    %v371 = vpack.c.bf16 %v317, %v317
    %v372 = vpack.c.bf16 %v324, %v324
    %v373 = vld [vmem:[#allocation5] sm:$0x3f]
    %v390 = vunpack.c.l.b16 %v357
    %v391 = vunpack.c.l.b16 %v358
    %v392 = vunpack.c.l.b16 %v359
    %v393 = vunpack.c.l.b16 %v360
    %v394 = vunpack.c.l.b16 %v361
    %v395 = vunpack.c.l.b16 %v362
    %v396 = vunpack.c.l.b16 %v363
    %v397 = vunpack.c.l.b16 %v364
    %v398 = vunpack.c.l.b16 %v365
    %v399 = vunpack.c.l.b16 %v366
    %v400 = vunpack.c.l.b16 %v367
    %v401 = vunpack.c.l.b16 %v368
    %v402 = vunpack.c.l.b16 %v369
    %v403 = vunpack.c.l.b16 %v370
    %v404 = vunpack.c.l.b16 %v371
    %v405 = vunpack.c.l.b16 %v372
    %vm406 = vcmask 1041409
    %v407 = vsel %vm406, %v391, %v390
    %vm408 = vcmask 1042434
    %v409 = vsel %vm408, %v392, %v407
    %vm410 = vcmask 1043459
    %v411 = vsel %vm410, %v393, %v409
    %vm412 = vcmask 1044484
    %v413 = vsel %vm412, %v394, %v411
    %vm414 = vcmask 1045509
    %v415 = vsel %vm414, %v395, %v413
    %vm416 = vcmask 1046534
    %v417 = vsel %vm416, %v396, %v415
    %vm418 = vcmask 1047559
    %v419 = vsel %vm418, %v397, %v417
    %v420 = vsel %vm406, %v399, %v398
    %v421 = vsel %vm408, %v400, %v420
    %v422 = vsel %vm410, %v401, %v421
    %v423 = vsel %vm412, %v402, %v422
    %v424 = vsel %vm414, %v403, %v423
    %v425 = vsel %vm416, %v404, %v424
    %v426 = vsel %vm418, %v405, %v425
    %v427 = vpack.c.b16 %v426, %v419
    %v429 = vcombine.high %v373, %v373
    %v431 = vunpack.c.l.s4 1983009808
    %v432 = vunpack.c.0.s8 %v431
    %v433 = vlaneseq
    %v434 = vshrl.u32 %v433, 7
    %v435 = vsub.s32 %v432, %v434
    %v436 = vrot.slane %v373, %v435
    %v438 = vunpack.c.l.s4 1983009808
    %v439 = vunpack.c.0.s8 %v438
    %v440 = vlaneseq
    %v441 = vshrl.u32 %v440, 7
    %v442 = vsub.s32 %v439, %v441
    %v443 = vrot.slane %v429, %v442
    %v444 = vcombine.high %v436, %v436
    %vm445 = vcmask 31744
    %v447 = vsel %vm445, %v427, 0
    %vm449 = vcmask 1041408
    %v451 = vsel %vm449, %v436, 0
    %v454 = vsel %vm449, %v444, 0
    %v457 = vsel %vm449, %v443, 0
    %459 = vmatprep.subr.bf16.mxu0 %v454
    %460 = vmatpush1.bf16.msra.mxu0 %v451
    %461 = vmatprep.subr.bf16.mxu0 0
    %462 = vmatpush1.bf16.msra.mxu0 0
    %463 = vmatprep.subr.bf16.mxu0 0
    %464 = vmatpush1.bf16.msra.mxu0 0
    %465 = vmatprep.subr.bf16.mxu0 0
    %466 = vmatpush1.bf16.msra.mxu0 0
    %467 = vmatprep.subr.bf16.mxu0 0
    %468 = vmatpush1.bf16.msra.mxu0 0
    %469 = vmatprep.subr.bf16.mxu0 0
    %470 = vmatpush1.bf16.msra.mxu0 0
    %471 = vmatprep.subr.bf16.mxu0 0
    %472 = vmatpush1.bf16.msra.mxu0 0
    %473 = vmatprep.subr.bf16.mxu0 0
    %474 = vmatpush1.bf16.msra.mxu0 0
    %475 = vmatprep.subr.bf16.mxu0 0
    %476 = vmatpush1.bf16.msra.mxu0 0
    %477 = vmatprep.subr.bf16.mxu0 0
    %478 = vmatpush1.bf16.msra.mxu0 0
    %479 = vmatprep.subr.bf16.mxu0 0
    %480 = vmatpush1.bf16.msra.mxu0 0
    %481 = vmatprep.subr.bf16.mxu0 0
    %482 = vmatpush1.bf16.msra.mxu0 0
    %483 = vmatprep.subr.bf16.mxu0 0
    %484 = vmatpush1.bf16.msra.mxu0 0
    %485 = vmatprep.subr.bf16.mxu0 0
    %486 = vmatpush1.bf16.msra.mxu0 0
    %487 = vmatprep.subr.bf16.mxu0 0
    %488 = vmatpush1.bf16.msra.mxu0 0
    %489 = vmatprep.subr.bf16.mxu0 0
    %490 = vmatpush1.bf16.msra.mxu0 0
    %491 = vmatprep.mubr.bf16.mxu0 0
    %492 = vmatmul.mubr.bf16.gmra.mrb[0].mxu0 %v447
    %v493 = vpop.f32.mrb[0].mxu0
    %v494 = vadd.f32 0.0, %v493
    %v495 = vpop.f32.mrb[0].mxu0
    %v496 = vadd.f32 0.0, %v495
    %v497 = vpop.f32.mrb[0].mxu0
    %v498 = vadd.f32 0.0, %v497
    %v499 = vpop.f32.mrb[0].mxu0
    %v500 = vadd.f32 0.0, %v499
    %501 = vdwg.mxu0
    %502 = vmatprep.subr.bf16.mxu0 0
    %503 = vmatpush1.bf16.msra.mxu0 %v457
    %504 = vmatprep.subr.bf16.mxu0 0
    %505 = vmatpush1.bf16.msra.mxu0 0
    %506 = vmatprep.subr.bf16.mxu0 0
    %507 = vmatpush1.bf16.msra.mxu0 0
    %508 = vmatprep.subr.bf16.mxu0 0
    %509 = vmatpush1.bf16.msra.mxu0 0
    %510 = vmatprep.subr.bf16.mxu0 0
    %511 = vmatpush1.bf16.msra.mxu0 0
    %512 = vmatprep.subr.bf16.mxu0 0
    %513 = vmatpush1.bf16.msra.mxu0 0
    %514 = vmatprep.subr.bf16.mxu0 0
    %515 = vmatpush1.bf16.msra.mxu0 0
    %516 = vmatprep.subr.bf16.mxu0 0
    %517 = vmatpush1.bf16.msra.mxu0 0
    %518 = vmatprep.subr.bf16.mxu0 0
    %519 = vmatpush1.bf16.msra.mxu0 0
    %520 = vmatprep.subr.bf16.mxu0 0
    %521 = vmatpush1.bf16.msra.mxu0 0
    %522 = vmatprep.subr.bf16.mxu0 0
    %523 = vmatpush1.bf16.msra.mxu0 0
    %524 = vmatprep.subr.bf16.mxu0 0
    %525 = vmatpush1.bf16.msra.mxu0 0
    %526 = vmatprep.subr.bf16.mxu0 0
    %527 = vmatpush1.bf16.msra.mxu0 0
    %528 = vmatprep.subr.bf16.mxu0 0
    %529 = vmatpush1.bf16.msra.mxu0 0
    %530 = vmatprep.subr.bf16.mxu0 0
    %531 = vmatpush1.bf16.msra.mxu0 0
    %532 = vmatprep.subr.bf16.mxu0 0
    %533 = vmatpush1.bf16.msra.mxu0 0
    %534 = vmatprep.mubr.bf16.mxu0 0
    %535 = vmatmul.mubr.bf16.gmra.mrb[0].mxu0 %v447
    %v536 = vpop.f32.mrb[0].mxu0
    %v537 = vadd.f32 0.0, %v536
    %v538 = vpop.f32.mrb[0].mxu0
    %v539 = vpop.f32.mrb[0].mxu0
    %v540 = vadd.f32 0.0, %v539
    %v541 = vpop.f32.mrb[0].mxu0
    %542 = vdwg.mxu0
    %v543 = vlaneseq
    %v544 = vshrl.u32 %v543, 7
    %v545 = vsub.s32 0, %v544
    %v546 = vrot.slane %v356, %v545
    %v547 = vadd.f32 %v496, %v546
    %v548 = vadd.f32 %v500, %v546
    %v549 = vrot.slane %v494, 7
    %v550 = vrot.slane %v498, 7
    %vm551 = vcmp.lt.s32.totalorder %v326, 1
    %v552 = vsel %vm551, %v549, %v550
    %v553 = vsel %vm551, %v550, %v549
    %v554 = vsel %vm352, 1, 0
    %v555 = vsel %vm353, 1, 0
    %vm556 = vcmp.eq.s32.totalorder %v554, 1
    %vm557 = vcmp.eq.s32.totalorder %v555, 1
    %v558 = vsel %vm556, %v553, 0.0
    %v559 = vsel %vm557, %v552, 0.0
    %v560 = vadd.f32 %v547, %v558
    %v561 = vadd.f32 %v548, %v559
    %v562 = vrot.slane %v537, 1
    %v563 = vrot.slane %v540, 1
    %vm564 = vcmp.lt.s32.totalorder %v326, 7
    %v565 = vsel %vm564, %v562, %v563
    %v566 = vsel %vm564, %v563, %v562
    %v567 = vsel %vm354, 1, 0
    %v568 = vsel %vm355, 1, 0
    %vm569 = vcmp.eq.s32.totalorder %v567, 1
    %vm570 = vcmp.eq.s32.totalorder %v568, 1
    %v571 = vsel %vm569, %v565, 0.0
    %v572 = vsel %vm570, %v566, 0.0
    %v573 = vadd.f32 %v560, %v571
    %v574 = vadd.f32 %v561, %v572
    %v575 = vrot.slane %v573, 4
    %v576 = vadd.f32 %v573, %v575
    %v577 = vrot.slane %v576, 2
    %v578 = vadd.f32 %v576, %v577
    %v579 = vrot.slane %v578, 1
    %v580 = vadd.f32 %v578, %v579
    %v581 = vrot.slane %v574, 4
    %v582 = vadd.f32 %v574, %v581
    %v583 = vrot.slane %v582, 2
    %v584 = vadd.f32 %v582, %v583
    %v585 = vrot.slane %v584, 1
    %v586 = vadd.f32 %v584, %v585
    %587 = vadd.xlane.f32.xlu0 %v580
    %v588 = vpop.xlane.xlu0 %587
    %589 = vadd.xlane.f32.xlu0 %v586
    %v590 = vpop.xlane.xlu0 %589
    %v591 = vmul.f32 %v573, %v573
    %v592 = vmul.f32 %v574, %v574
    %v593 = vrot.slane %v591, 4
    %v594 = vadd.f32 %v591, %v593
    %v595 = vrot.slane %v594, 2
    %v596 = vadd.f32 %v594, %v595
    %v597 = vrot.slane %v596, 1
    %v598 = vadd.f32 %v596, %v597
    %v599 = vrot.slane %v592, 4
    %v600 = vadd.f32 %v592, %v599
    %v601 = vrot.slane %v600, 2
    %v602 = vadd.f32 %v600, %v601
    %v603 = vrot.slane %v602, 1
    %v604 = vadd.f32 %v602, %v603
    %605 = vadd.xlane.f32.xlu0 %v598
    %v606 = vpop.xlane.xlu0 %605
    %607 = vadd.xlane.f32.xlu0 %v604
    %v608 = vpop.xlane.xlu0 %607
    %v609 = vmul.f32 %v588, 0.015625
    %v610 = vmul.f32 %v590, 0.015625
    %v611 = vmul.f32 %v606, 0.015625
    %v612 = vmul.f32 %v608, 0.015625
    %v613 = vmul.f32 %v609, %v609
    %v614 = vmul.f32 %v610, %v610
    %v615 = vsub.f32 %v611, %v613
    %v616 = vsub.f32 %v612, %v614
    %v617 = vmax.f32 %v615, 0.0
    %v618 = vmax.f32 %v616, 0.0
    %v619 = vsub.f32 %v573, %v609
    %v620 = vsub.f32 %v574, %v610
    %v621 = vadd.f32 %v617, 1e-05
    %v622 = vadd.f32 %v618, 1e-05
    %v623 = vrsqrt.pop %v621
    %v624 = vrsqrt.pop %v622
    %v625 = vmul.f32 %v619, %v623
    %v626 = vmul.f32 %v620, %v624
    %v627 = vlaneseq
    %v628 = vshrl.u32 %v627, 7
    %v629 = vsub.s32 1, %v628
    %v630 = vrot.slane %v356, %v629
    %v631 = vmul.f32 %v625, %v630
    %v632 = vmul.f32 %v626, %v630
    %v633 = vlaneseq
    %v634 = vshrl.u32 %v633, 7
    %v635 = vsub.s32 2, %v634
    %v636 = vrot.slane %v356, %v635
    %v637 = vadd.f32 %v631, %v636
    %v638 = vadd.f32 %v632, %v636
    %v639 = vmul.f32 %v637, 0.5
    %v640 = vmul.f32 %v638, 0.5
    %v641 = vmul.f32 %v637, 0.70710677
    %v642 = vmul.f32 %v638, 0.70710677
    %v643 = verf.f32.pop %v641
    %v644 = verf.f32.pop %v642
    %v645 = vadd.f32 %v643, 1.0
    %v646 = vadd.f32 %v644, 1.0
    %v647 = vmul.f32 %v639, %v645
    %v648 = vmul.f32 %v640, %v646
    %v649 = vpack.c.bf16 %v648, %v647
    %v650 = vld [vmem:[#allocation7] sm:$0xff]
    %v651 = vld [vmem:[#allocation7 + $0x8] sm:$0xf]
    %v652 = vld [vmem:[#allocation7 + $0xc] sm:$0xff]
    %v653 = vld [vmem:[#allocation7 + $0x14] sm:$0xf]
    %v654 = vld [vmem:[#allocation7 + $0x18] sm:$0xff]
    %v655 = vld [vmem:[#allocation7 + $0x20] sm:$0xf]
    %v656 = vld [vmem:[#allocation7 + $0x24] sm:$0xff]
    %v657 = vld [vmem:[#allocation7 + $0x2c] sm:$0xf]
    %v658 = vld [vmem:[#allocation7 + $0x30] sm:$0xff]
    %v659 = vld [vmem:[#allocation7 + $0x38] sm:$0xf]
    %v660 = vld [vmem:[#allocation7 + $0x3c] sm:$0xff]
    %v661 = vld [vmem:[#allocation7 + $0x44] sm:$0xf]
    %v662 = vld [vmem:[#allocation7 + $0x48] sm:$0xff]
    %v663 = vld [vmem:[#allocation7 + $0x50] sm:$0xf]
    %v664 = vld [vmem:[#allocation7 + $0x54] sm:$0xff]
    %v665 = vld [vmem:[#allocation7 + $0x5c] sm:$0xf]
    %v666 = vld [vmem:[#allocation7 + $0x60] sm:$0xff]
    %v667 = vld [vmem:[#allocation7 + $0x68] sm:$0xf]
    %v668 = vld [vmem:[#allocation7 + $0x6c] sm:$0xff]
    %v669 = vld [vmem:[#allocation7 + $0x74] sm:$0xf]
    %v670 = vld [vmem:[#allocation7 + $0x78] sm:$0xff]
    %v671 = vld [vmem:[#allocation7 + $0x80] sm:$0xf]
    %v672 = vld [vmem:[#allocation7 + $0x84] sm:$0xff]
    %v673 = vld [vmem:[#allocation7 + $0x8c] sm:$0xf]
    %v674 = vld [vmem:[#allocation7 + $0x90] sm:$0xff]
    %v675 = vld [vmem:[#allocation7 + $0x98] sm:$0xf]
    %v676 = vld [vmem:[#allocation7 + $0x9c] sm:$0xff]
    %v677 = vld [vmem:[#allocation7 + $0xa4] sm:$0xf]
    %v678 = vld [vmem:[#allocation7 + $0xa8] sm:$0xff]
    %v679 = vld [vmem:[#allocation7 + $0xb0] sm:$0xf]
    %v680 = vld [vmem:[#allocation7 + $0xb4] sm:$0xff]
    %v681 = vld [vmem:[#allocation7 + $0xbc] sm:$0xf]
    %v714 = vunpack.c.l.b16 %v650
    %v715 = vunpack.c.h.b16 %v650
    %v716 = vunpack.c.l.b16 %v651
    %v717 = vunpack.c.l.b16 %v652
    %v718 = vunpack.c.h.b16 %v652
    %v719 = vunpack.c.l.b16 %v653
    %v720 = vunpack.c.l.b16 %v654
    %v721 = vunpack.c.h.b16 %v654
    %v722 = vunpack.c.l.b16 %v655
    %v723 = vunpack.c.l.b16 %v656
    %v724 = vunpack.c.h.b16 %v656
    %v725 = vunpack.c.l.b16 %v657
    %v726 = vunpack.c.l.b16 %v658
    %v727 = vunpack.c.h.b16 %v658
    %v728 = vunpack.c.l.b16 %v659
    %v729 = vunpack.c.l.b16 %v660
    %v730 = vunpack.c.h.b16 %v660
    %v731 = vunpack.c.l.b16 %v661
    %v732 = vunpack.c.l.b16 %v662
    %v733 = vunpack.c.h.b16 %v662
    %v734 = vunpack.c.l.b16 %v663
    %v735 = vunpack.c.l.b16 %v664
    %v736 = vunpack.c.h.b16 %v664
    %v737 = vunpack.c.l.b16 %v665
    %v738 = vunpack.c.l.b16 %v666
    %v739 = vunpack.c.h.b16 %v666
    %v740 = vunpack.c.l.b16 %v667
    %v741 = vunpack.c.l.b16 %v668
    %v742 = vunpack.c.h.b16 %v668
    %v743 = vunpack.c.l.b16 %v669
    %v744 = vunpack.c.l.b16 %v670
    %v745 = vunpack.c.h.b16 %v670
    %v746 = vunpack.c.l.b16 %v671
    %v747 = vunpack.c.l.b16 %v672
    %v748 = vunpack.c.h.b16 %v672
    %v749 = vunpack.c.l.b16 %v673
    %v750 = vunpack.c.l.b16 %v674
    %v751 = vunpack.c.h.b16 %v674
    %v752 = vunpack.c.l.b16 %v675
    %v753 = vunpack.c.l.b16 %v676
    %v754 = vunpack.c.h.b16 %v676
    %v755 = vunpack.c.l.b16 %v677
    %v756 = vunpack.c.l.b16 %v678
    %v757 = vunpack.c.h.b16 %v678
    %v758 = vunpack.c.l.b16 %v679
    %v759 = vunpack.c.l.b16 %v680
    %v760 = vunpack.c.h.b16 %v680
    %v761 = vunpack.c.l.b16 %v681
    %v762 = vpack.c.b16 %v717, %v714
    %v763 = vpack.c.b16 %v718, %v715
    %v764 = vpack.c.b16 %v719, %v716
    %v765 = vpack.c.b16 %v723, %v720
    %v766 = vpack.c.b16 %v724, %v721
    %v767 = vpack.c.b16 %v725, %v722
    %v768 = vpack.c.b16 %v729, %v726
    %v769 = vpack.c.b16 %v730, %v727
    %v770 = vpack.c.b16 %v731, %v728
    %v771 = vpack.c.b16 %v735, %v732
    %v772 = vpack.c.b16 %v736, %v733
    %v773 = vpack.c.b16 %v737, %v734
    %v774 = vpack.c.b16 %v741, %v738
    %v775 = vpack.c.b16 %v742, %v739
    %v776 = vpack.c.b16 %v743, %v740
    %v777 = vpack.c.b16 %v747, %v744
    %v778 = vpack.c.b16 %v748, %v745
    %v779 = vpack.c.b16 %v749, %v746
    %v780 = vpack.c.b16 %v753, %v750
    %v781 = vpack.c.b16 %v754, %v751
    %v782 = vpack.c.b16 %v755, %v752
    %v783 = vpack.c.b16 %v759, %v756
    %v784 = vpack.c.b16 %v760, %v757
    %v785 = vpack.c.b16 %v761, %v758
    %810 = vmatprep.subr.bf16.mxu0 %v763
    %811 = vmatpush1.bf16.msra.mxu0 %v762
    %812 = vmatprep.subr.bf16.mxu0 %v766
    %813 = vmatpush1.bf16.msra.mxu0 %v765
    %814 = vmatprep.subr.bf16.mxu0 %v769
    %815 = vmatpush1.bf16.msra.mxu0 %v768
    %816 = vmatprep.subr.bf16.mxu0 %v772
    %817 = vmatpush1.bf16.msra.mxu0 %v771
    %818 = vmatprep.subr.bf16.mxu0 %v775
    %819 = vmatpush1.bf16.msra.mxu0 %v774
    %820 = vmatprep.subr.bf16.mxu0 %v778
    %821 = vmatpush1.bf16.msra.mxu0 %v777
    %822 = vmatprep.subr.bf16.mxu0 %v781
    %823 = vmatpush1.bf16.msra.mxu0 %v780
    %824 = vmatprep.subr.bf16.mxu0 %v784
    %825 = vmatpush1.bf16.msra.mxu0 %v783
    %826 = vmatprep.subr.bf16.mxu0 0
    %827 = vmatpush1.bf16.msra.mxu0 0
    %828 = vmatprep.subr.bf16.mxu0 0
    %829 = vmatpush1.bf16.msra.mxu0 0
    %830 = vmatprep.subr.bf16.mxu0 0
    %831 = vmatpush1.bf16.msra.mxu0 0
    %832 = vmatprep.subr.bf16.mxu0 0
    %833 = vmatpush1.bf16.msra.mxu0 0
    %834 = vmatprep.subr.bf16.mxu0 0
    %835 = vmatpush1.bf16.msra.mxu0 0
    %836 = vmatprep.subr.bf16.mxu0 0
    %837 = vmatpush1.bf16.msra.mxu0 0
    %838 = vmatprep.subr.bf16.mxu0 0
    %839 = vmatpush1.bf16.msra.mxu0 0
    %840 = vmatprep.subr.bf16.mxu0 0
    %841 = vmatpush1.bf16.msra.mxu0 0
    %842 = vmatprep.mubr.bf16.mxu0 0
    %843 = vmatmul.mubr.bf16.gmra.mrb[0].mxu0 %v649
    %v844 = vpop.f32.mrb[0].mxu0
    %v845 = vadd.f32 0.0, %v844
    %v846 = vpop.f32.mrb[0].mxu0
    %v847 = vadd.f32 0.0, %v846
    %v848 = vpop.f32.mrb[0].mxu0
    %v849 = vadd.f32 0.0, %v848
    %v850 = vpop.f32.mrb[0].mxu0
    %v851 = vadd.f32 0.0, %v850
    %852 = vdwg.mxu0
    %853 = vmatprep.subr.bf16.mxu0 0
    %854 = vmatpush1.bf16.msra.mxu0 %v764
    %855 = vmatprep.subr.bf16.mxu0 0
    %856 = vmatpush1.bf16.msra.mxu0 %v767
    %857 = vmatprep.subr.bf16.mxu0 0
    %858 = vmatpush1.bf16.msra.mxu0 %v770
    %859 = vmatprep.subr.bf16.mxu0 0
    %860 = vmatpush1.bf16.msra.mxu0 %v773
    %861 = vmatprep.subr.bf16.mxu0 0
    %862 = vmatpush1.bf16.msra.mxu0 %v776
    %863 = vmatprep.subr.bf16.mxu0 0
    %864 = vmatpush1.bf16.msra.mxu0 %v779
    %865 = vmatprep.subr.bf16.mxu0 0
    %866 = vmatpush1.bf16.msra.mxu0 %v782
    %867 = vmatprep.subr.bf16.mxu0 0
    %868 = vmatpush1.bf16.msra.mxu0 %v785
    %869 = vmatprep.subr.bf16.mxu0 0
    %870 = vmatpush1.bf16.msra.mxu0 0
    %871 = vmatprep.subr.bf16.mxu0 0
    %872 = vmatpush1.bf16.msra.mxu0 0
    %873 = vmatprep.subr.bf16.mxu0 0
    %874 = vmatpush1.bf16.msra.mxu0 0
    %875 = vmatprep.subr.bf16.mxu0 0
    %876 = vmatpush1.bf16.msra.mxu0 0
    %877 = vmatprep.subr.bf16.mxu0 0
    %878 = vmatpush1.bf16.msra.mxu0 0
    %879 = vmatprep.subr.bf16.mxu0 0
    %880 = vmatpush1.bf16.msra.mxu0 0
    %881 = vmatprep.subr.bf16.mxu0 0
    %882 = vmatpush1.bf16.msra.mxu0 0
    %883 = vmatprep.subr.bf16.mxu0 0
    %884 = vmatpush1.bf16.msra.mxu0 0
    %885 = vmatprep.mubr.bf16.mxu0 0
    %886 = vmatmul.mubr.bf16.gmra.mrb[0].mxu0 %v649
    %v887 = vpop.f32.mrb[0].mxu0
    %v888 = vadd.f32 0.0, %v887
    %v889 = vpop.f32.mrb[0].mxu0
    %v890 = vpop.f32.mrb[0].mxu0
    %v891 = vadd.f32 0.0, %v890
    %v892 = vpop.f32.mrb[0].mxu0
    %893 = vdwg.mxu0
    %v894 = vlaneseq
    %v895 = vshrl.u32 %v894, 7
    %v896 = vsub.s32 3, %v895
    %v897 = vrot.slane %v356, %v896
    %v898 = vadd.f32 %v847, %v897
    %v899 = vadd.f32 %v851, %v897
    %v900 = vrot.slane %v845, 7
    %v901 = vrot.slane %v849, 7
    %v902 = vsel %vm551, %v900, %v901
    %v903 = vsel %vm551, %v901, %v900
    %v904 = vsel %vm556, %v903, 0.0
    %v905 = vsel %vm557, %v902, 0.0
    %v906 = vadd.f32 %v898, %v904
    %v907 = vadd.f32 %v899, %v905
    %v908 = vrot.slane %v888, 1
    %v909 = vrot.slane %v891, 1
    %v910 = vsel %vm564, %v908, %v909
    %v911 = vsel %vm564, %v909, %v908
    %v912 = vsel %vm569, %v910, 0.0
    %v913 = vsel %vm570, %v911, 0.0
    %v914 = vadd.f32 %v906, %v912
    %v915 = vadd.f32 %v907, %v913
    %v916 = vrot.slane %v914, 4
    %v917 = vadd.f32 %v914, %v916
    %v918 = vrot.slane %v917, 2
    %v919 = vadd.f32 %v917, %v918
    %v920 = vrot.slane %v919, 1
    %v921 = vadd.f32 %v919, %v920
    %v922 = vrot.slane %v915, 4
    %v923 = vadd.f32 %v915, %v922
    %v924 = vrot.slane %v923, 2
    %v925 = vadd.f32 %v923, %v924
    %v926 = vrot.slane %v925, 1
    %v927 = vadd.f32 %v925, %v926
    %928 = vadd.xlane.f32.xlu0 %v921
    %v929 = vpop.xlane.xlu0 %928
    %930 = vadd.xlane.f32.xlu0 %v927
    %v931 = vpop.xlane.xlu0 %930
    %v932 = vmul.f32 %v914, %v914
    %v933 = vmul.f32 %v915, %v915
    %v934 = vrot.slane %v932, 4
    %v935 = vadd.f32 %v932, %v934
    %v936 = vrot.slane %v935, 2
    %v937 = vadd.f32 %v935, %v936
    %v938 = vrot.slane %v937, 1
    %v939 = vadd.f32 %v937, %v938
    %v940 = vrot.slane %v933, 4
    %v941 = vadd.f32 %v933, %v940
    %v942 = vrot.slane %v941, 2
    %v943 = vadd.f32 %v941, %v942
    %v944 = vrot.slane %v943, 1
    %v945 = vadd.f32 %v943, %v944
    %946 = vadd.xlane.f32.xlu0 %v939
    %v947 = vpop.xlane.xlu0 %946
    %948 = vadd.xlane.f32.xlu0 %v945
    %v949 = vpop.xlane.xlu0 %948
    %v950 = vmul.f32 %v929, 0.015625
    %v951 = vmul.f32 %v931, 0.015625
    %v952 = vmul.f32 %v947, 0.015625
    %v953 = vmul.f32 %v949, 0.015625
    %v954 = vmul.f32 %v950, %v950
    %v955 = vmul.f32 %v951, %v951
    %v956 = vsub.f32 %v952, %v954
    %v957 = vsub.f32 %v953, %v955
    %v958 = vmax.f32 %v956, 0.0
    %v959 = vmax.f32 %v957, 0.0
    %v960 = vsub.f32 %v914, %v950
    %v961 = vsub.f32 %v915, %v951
    %v962 = vadd.f32 %v958, 1e-05
    %v963 = vadd.f32 %v959, 1e-05
    %v964 = vrsqrt.pop %v962
    %v965 = vrsqrt.pop %v963
    %v966 = vmul.f32 %v960, %v964
    %v967 = vmul.f32 %v961, %v965
    %v968 = vlaneseq
    %v969 = vshrl.u32 %v968, 7
    %v970 = vsub.s32 4, %v969
    %v971 = vrot.slane %v356, %v970
    %v972 = vmul.f32 %v966, %v971
    %v973 = vmul.f32 %v967, %v971
    %v974 = vlaneseq
    %v975 = vshrl.u32 %v974, 7
    %v976 = vsub.s32 5, %v975
    %v977 = vrot.slane %v356, %v976
    %v978 = vadd.f32 %v972, %v977
    %v979 = vadd.f32 %v973, %v977
    %v980 = vmul.f32 %v978, 0.5
    %v981 = vmul.f32 %v979, 0.5
    %v982 = vmul.f32 %v978, 0.70710677
    %v983 = vmul.f32 %v979, 0.70710677
    %v984 = verf.f32.pop %v982
    %v985 = verf.f32.pop %v983
    %v986 = vadd.f32 %v984, 1.0
    %v987 = vadd.f32 %v985, 1.0
    %v988 = vmul.f32 %v980, %v986
    %v989 = vmul.f32 %v981, %v987
    %990 = vxpose.xlu0.b32.start [1/16] %v988, 128
    %991 = vxpose.xlu0.b32.cont [2/16] 0.0, 128
    %992 = vxpose.xlu0.b32.cont [3/16] 0.0, 128
    %993 = vxpose.xlu0.b32.cont [4/16] 0.0, 128
    %994 = vxpose.xlu0.b32.cont [5/16] 0.0, 128
    %995 = vxpose.xlu0.b32.cont [6/16] 0.0, 128
    %996 = vxpose.xlu0.b32.cont [7/16] 0.0, 128
    %997 = vxpose.xlu0.b32.cont [8/16] 0.0, 128
    %998 = vxpose.xlu0.b32.cont [9/16] 0.0, 128
    %999 = vxpose.xlu0.b32.cont [10/16] 0.0, 128
    %1000 = vxpose.xlu0.b32.cont [11/16] 0.0, 128
    %1001 = vxpose.xlu0.b32.cont [12/16] 0.0, 128
    %1002 = vxpose.xlu0.b32.cont [13/16] 0.0, 128
    %1003 = vxpose.xlu0.b32.cont [14/16] 0.0, 128
    %1004 = vxpose.xlu0.b32.cont [15/16] 0.0, 128
    %1005 = vxpose.xlu0.b32.end [16/16] 0.0, 128
    %v1006 = vpop.trf.xlu0
    %v1007 = vpop.trf.xlu0
    %v1008 = vpop.trf.xlu0
    %v1009 = vpop.trf.xlu0
    %v1010 = vpop.trf.xlu0
    %v1011 = vpop.trf.xlu0
    %v1012 = vpop.trf.xlu0
    %v1013 = vpop.trf.xlu0
    %v1014 = vpop.trf.xlu0
    %v1015 = vpop.trf.xlu0
    %v1016 = vpop.trf.xlu0
    %v1017 = vpop.trf.xlu0
    %v1018 = vpop.trf.xlu0
    %v1019 = vpop.trf.xlu0
    %v1020 = vpop.trf.xlu0
    %v1021 = vpop.trf.xlu0
    %1022 = vxpose.xlu0.b32.start [1/16] %v989, 128
    %1023 = vxpose.xlu0.b32.cont [2/16] 0.0, 128
    %1024 = vxpose.xlu0.b32.cont [3/16] 0.0, 128
    %1025 = vxpose.xlu0.b32.cont [4/16] 0.0, 128
    %1026 = vxpose.xlu0.b32.cont [5/16] 0.0, 128
    %1027 = vxpose.xlu0.b32.cont [6/16] 0.0, 128
    %1028 = vxpose.xlu0.b32.cont [7/16] 0.0, 128
    %1029 = vxpose.xlu0.b32.cont [8/16] 0.0, 128
    %1030 = vxpose.xlu0.b32.cont [9/16] 0.0, 128
    %1031 = vxpose.xlu0.b32.cont [10/16] 0.0, 128
    %1032 = vxpose.xlu0.b32.cont [11/16] 0.0, 128
    %1033 = vxpose.xlu0.b32.cont [12/16] 0.0, 128
    %1034 = vxpose.xlu0.b32.cont [13/16] 0.0, 128
    %1035 = vxpose.xlu0.b32.cont [14/16] 0.0, 128
    %1036 = vxpose.xlu0.b32.cont [15/16] 0.0, 128
    %1037 = vxpose.xlu0.b32.end [16/16] 0.0, 128
    %v1038 = vpop.trf.xlu0
    %v1039 = vpop.trf.xlu0
    %v1040 = vpop.trf.xlu0
    %v1041 = vpop.trf.xlu0
    %v1042 = vpop.trf.xlu0
    %v1043 = vpop.trf.xlu0
    %v1044 = vpop.trf.xlu0
    %v1045 = vpop.trf.xlu0
    %v1046 = vpop.trf.xlu0
    %v1047 = vpop.trf.xlu0
    %v1048 = vpop.trf.xlu0
    %v1049 = vpop.trf.xlu0
    %v1050 = vpop.trf.xlu0
    %v1051 = vpop.trf.xlu0
    %v1052 = vpop.trf.xlu0
    %v1053 = vpop.trf.xlu0
    %vm1054 = vcmask 64512
    %1055 = vst.msk [vmem:[#allocation8] sm:$0xff] %vm1054, %v1006
    %1056 = vst.msk [vmem:[#allocation8 + $0x8] sm:$0xff] %vm1054, %v1038
    // Predicated region
    $region30: #{tpu_custom_call.1} parent=1 // pred_check
      _
    $region31: #{tpu_custom_call.1} parent=1 // pred_check_branch
      %1058 = sbr.rel (0) target = $region33
    $region32: #{tpu_custom_call.1} parent=1 // pred_region
      %s1060 = ssub.s32 256, 256
      %1061 = vsyncadd [#allocation4], %s1060
      %s1062 = sshll.u32 [#allocation8], 4
      %s1063 = int_to_ptr.vmem [resolvable:$true] %s1062
      %1068 = dma.vmem_to_hbm [thread:$0]  %s1063, 256, %s4, [#allocation4], 128, 128, 8
    $region33: #{tpu_custom_call.1} parent=1 // pred_fallthru
      _
    // Predicated region
    $region34: #{tpu_custom_call.1} parent=1 // pred_check
      _
    $region35: #{tpu_custom_call.1} parent=1 // pred_check_branch
      %1070 = sbr.rel (0) target = $region37
    $region36: #{tpu_custom_call.1} parent=1 // pred_region
      %1071 = dma.done [#allocation4], 256
    $region37: #{tpu_custom_call.1} parent=1 // pred_fallthru
      _
    %1072 = vsyncpa [#allocation3], 1
    %1073 = vsyncpa [#allocation6], 1
    %1074 = vsyncpa [#allocation4], 1

// kernel: tpu_custom_call.1
$region0: #{tpu_custom_call.1}
  #allocation0 [shape = 'u32[]', space=smem, size = 0x4, offset = 0x4, fixed_abs, tag = 'smem constant byte address 0x4 - core index']
  #allocation1 [shape = 'u32[144,128]{1,0:T(1,128)}', space=vmem, size = 0x12000, scoped, tag = 'internal scratch']
  %s0 = inlined_call_operand.hbm [shape: f32[2,4,16], index: 0, kind: input, shape index: {}]
  %s1 = inlined_call_operand.hbm [shape: bf16[4,384], index: 1, kind: input, shape index: {}]
  %s2 = inlined_call_operand.hbm [shape: bf16[128,384], index: 2, kind: input, shape index: {}]
  %s3 = inlined_call_operand.vmem [shape: f32[8,128], index: 3, kind: input, shape index: {}]
  %s4 = inlined_call_operand.hbm [shape: f32[2,8,8], index: 4, kind: output, shape index: {}]
  %s5 = sld [smem:[#allocation0]]
  $region38: #{tpu_custom_call.1} parent=0
    _
  %s7 = ssub.s32 1, %s5
  %s8 = scalar_select 0, %s7, %s5
  $region1: #{tpu_custom_call.1} parent=0
    #allocation2 [shape = 'u8[4096]{0}', space=vmem, size = 0x1000, scoped, tag = 'input window, operand 0, single buffered']
    #allocation3 [shape = 's32[1]{0}', space=sflag, size = 0x4, scoped, tag = 'scoped memory for tpu_custom_call.1']
    #allocation4 [shape = 's32[1]{0}', space=sflag, size = 0x4, scoped, tag = 'scoped memory for tpu_custom_call.1']
    #allocation5 [shape = 'u8[3072]{0}', space=vmem, size = 0xc00, scoped, tag = 'input window, operand 1, single buffered']
    #allocation6 [shape = 's32[1]{0}', space=sflag, size = 0x4, scoped, tag = 'scoped memory for tpu_custom_call.1']
    #allocation7 [shape = 'u8[98304]{0}', space=vmem, size = 0x18000, scoped, tag = 'input window, operand 2, single buffered']
    #allocation8 [shape = 'u8[8192]{0}', space=vmem, size = 0x2000, scoped, tag = 'output window, operand 0, single buffered']
    %9 = vsyncpa [#allocation3], 0
    %10 = vsyncpa [#allocation6], 0
    %11 = vsyncpa [#allocation4], 0
    // Predicated region
    $region2: #{tpu_custom_call.1} parent=1 // pred_check
      _
    $region3: #{tpu_custom_call.1} parent=1 // pred_check_branch
      %13 = sbr.rel (0) target = $region5
    $region4: #{tpu_custom_call.1} parent=1 // pred_region
      %s15 = ssub.s32 128, 128
      %16 = vsyncadd [#allocation3], %s15
      %s17 = sshll.u32 [#allocation2], 4
      %s18 = int_to_ptr.vmem [resolvable:$true] %s17
      %23 = dma.hbm_to_vmem [thread:$0]  %s0, 128, %s18, [#allocation3], 64, 64, 4
    $region5: #{tpu_custom_call.1} parent=1 // pred_fallthru
      _
    // Predicated region
    $region6: #{tpu_custom_call.1} parent=1 // pred_check
      _
    $region7: #{tpu_custom_call.1} parent=1 // pred_check_branch
      %25 = sbr.rel (0) target = $region9
    $region8: #{tpu_custom_call.1} parent=1 // pred_region
      %s27 = ssub.s32 96, 96
      %28 = vsyncadd [#allocation6], %s27
      %s30 = sshll.u32 [#allocation5], 4
      %s31 = int_to_ptr.vmem [resolvable:$true] %s30
      %33 = dma.hbm_to_vmem [thread:$0]  %s1, 96, %s31, [#allocation6]
    $region9: #{tpu_custom_call.1} parent=1 // pred_fallthru
      _
    // Predicated region
    $region10: #{tpu_custom_call.1} parent=1 // pred_check
      _
    $region11: #{tpu_custom_call.1} parent=1 // pred_check_branch
      %35 = sbr.rel (0) target = $region13
    $region12: #{tpu_custom_call.1} parent=1 // pred_region
      %s37 = ssub.s32 3072, 3072
      %38 = vsyncadd [#allocation6], %s37
      %s39 = sshll.u32 [#allocation7], 4
      %s40 = int_to_ptr.vmem [resolvable:$true] %s39
      %45 = dma.hbm_to_vmem [thread:$0]  %s2, 3072, %s40, [#allocation6], 192, 192, 12
    $region13: #{tpu_custom_call.1} parent=1 // pred_fallthru
      _
    // Predicated region
    $region14: #{tpu_custom_call.1} parent=1 // pred_check
      _
    $region15: #{tpu_custom_call.1} parent=1 // pred_check_branch
      %47 = sbr.rel (0) target = $region17
    $region16: #{tpu_custom_call.1} parent=1 // pred_region
      _
    $region17: #{tpu_custom_call.1} parent=1 // pred_fallthru
      _
    // Predicated region
    $region18: #{tpu_custom_call.1} parent=1 // pred_check
      _
    $region19: #{tpu_custom_call.1} parent=1 // pred_check_branch
      %49 = sbr.rel (0) target = $region21
    $region20: #{tpu_custom_call.1} parent=1 // pred_region
      %50 = dma.done [#allocation3], 128
    $region21: #{tpu_custom_call.1} parent=1 // pred_fallthru
      _
    // Predicated region
    $region22: #{tpu_custom_call.1} parent=1 // pred_check
      _
    $region23: #{tpu_custom_call.1} parent=1 // pred_check_branch
      %52 = sbr.rel (0) target = $region25
    $region24: #{tpu_custom_call.1} parent=1 // pred_region
      %53 = dma.done [#allocation6], 96
    $region25: #{tpu_custom_call.1} parent=1 // pred_fallthru
      _
    // Predicated region
    $region26: #{tpu_custom_call.1} parent=1 // pred_check
      _
    $region27: #{tpu_custom_call.1} parent=1 // pred_check_branch
      %55 = sbr.rel (0) target = $region29
    $region28: #{tpu_custom_call.1} parent=1 // pred_region
      %56 = dma.done [#allocation6], 3072
    $region29: #{tpu_custom_call.1} parent=1 // pred_fallthru
      _
    %v58 = vld [vmem:[#allocation2] sm:$0xf]
    %v59 = vld [vmem:[#allocation2 + $0x4] sm:$0xf]
    %60 = vxpose.xlu0.b32.start [1/16] %v58, 128
    %61 = vxpose.xlu0.b32.cont [2/16] 0.0, 128
    %62 = vxpose.xlu0.b32.cont [3/16] 0.0, 128
    %63 = vxpose.xlu0.b32.cont [4/16] 0.0, 128
    %64 = vxpose.xlu0.b32.cont [5/16] 0.0, 128
    %65 = vxpose.xlu0.b32.cont [6/16] 0.0, 128
    %66 = vxpose.xlu0.b32.cont [7/16] 0.0, 128
    %67 = vxpose.xlu0.b32.cont [8/16] 0.0, 128
    %68 = vxpose.xlu0.b32.cont [9/16] 0.0, 128
    %69 = vxpose.xlu0.b32.cont [10/16] 0.0, 128
    %70 = vxpose.xlu0.b32.cont [11/16] 0.0, 128
    %71 = vxpose.xlu0.b32.cont [12/16] 0.0, 128
    %72 = vxpose.xlu0.b32.cont [13/16] 0.0, 128
    %73 = vxpose.xlu0.b32.cont [14/16] 0.0, 128
    %74 = vxpose.xlu0.b32.cont [15/16] 0.0, 128
    %75 = vxpose.xlu0.b32.end [16/16] 0.0, 128
    %v76 = vpop.trf.xlu0
    %v77 = vpop.trf.xlu0
    %v78 = vpop.trf.xlu0
    %v79 = vpop.trf.xlu0
    %v80 = vpop.trf.xlu0
    %v81 = vpop.trf.xlu0
    %v82 = vpop.trf.xlu0
    %v83 = vpop.trf.xlu0
    %v84 = vpop.trf.xlu0
    %v85 = vpop.trf.xlu0
    %v86 = vpop.trf.xlu0
    %v87 = vpop.trf.xlu0
    %v88 = vpop.trf.xlu0
    %v89 = vpop.trf.xlu0
    %v90 = vpop.trf.xlu0
    %v91 = vpop.trf.xlu0
    %92 = vxpose.xlu0.b32.start [1/16] %v59, 128
    %93 = vxpose.xlu0.b32.cont [2/16] 0.0, 128
    %94 = vxpose.xlu0.b32.cont [3/16] 0.0, 128
    %95 = vxpose.xlu0.b32.cont [4/16] 0.0, 128
    %96 = vxpose.xlu0.b32.cont [5/16] 0.0, 128
    %97 = vxpose.xlu0.b32.cont [6/16] 0.0, 128
    %98 = vxpose.xlu0.b32.cont [7/16] 0.0, 128
    %99 = vxpose.xlu0.b32.cont [8/16] 0.0, 128
    %100 = vxpose.xlu0.b32.cont [9/16] 0.0, 128
    %101 = vxpose.xlu0.b32.cont [10/16] 0.0, 128
    %102 = vxpose.xlu0.b32.cont [11/16] 0.0, 128
    %103 = vxpose.xlu0.b32.cont [12/16] 0.0, 128
    %104 = vxpose.xlu0.b32.cont [13/16] 0.0, 128
    %105 = vxpose.xlu0.b32.cont [14/16] 0.0, 128
    %106 = vxpose.xlu0.b32.cont [15/16] 0.0, 128
    %107 = vxpose.xlu0.b32.end [16/16] 0.0, 128
    %v108 = vpop.trf.xlu0
    %v109 = vpop.trf.xlu0
    %v110 = vpop.trf.xlu0
    %v111 = vpop.trf.xlu0
    %v112 = vpop.trf.xlu0
    %v113 = vpop.trf.xlu0
    %v114 = vpop.trf.xlu0
    %v115 = vpop.trf.xlu0
    %v116 = vpop.trf.xlu0
    %v117 = vpop.trf.xlu0
    %v118 = vpop.trf.xlu0
    %v119 = vpop.trf.xlu0
    %v120 = vpop.trf.xlu0
    %v121 = vpop.trf.xlu0
    %v122 = vpop.trf.xlu0
    %v123 = vpop.trf.xlu0
    %v128 = vcombine.high %v76, %v76
    %v130 = vunpack.c.l.s4 1983009808
    %v131 = vunpack.c.0.s8 %v130
    %v132 = vlaneseq
    %v133 = vshrl.u32 %v132, 7
    %v134 = vsub.s32 %v131, %v133
    %v135 = vrot.slane %v76, %v134
    %v137 = vunpack.c.l.s4 1983009808
    %v138 = vunpack.c.0.s8 %v137
    %v139 = vlaneseq
    %v140 = vshrl.u32 %v139, 7
    %v141 = vsub.s32 %v138, %v140
    %v142 = vrot.slane %v128, %v141
    %v143 = vcombine.high %v135, %v135
    %v144 = vcombine.high %v142, %v142
    %v145 = vcombine.high %v77, %v77
    %v147 = vunpack.c.l.s4 1983009808
    %v148 = vunpack.c.0.s8 %v147
    %v149 = vlaneseq
    %v150 = vshrl.u32 %v149, 7
    %v151 = vsub.s32 %v148, %v150
    %v152 = vrot.slane %v77, %v151
    %v154 = vunpack.c.l.s4 1983009808
    %v155 = vunpack.c.0.s8 %v154
    %v156 = vlaneseq
    %v157 = vshrl.u32 %v156, 7
    %v158 = vsub.s32 %v155, %v157
    %v159 = vrot.slane %v145, %v158
    %v160 = vcombine.high %v152, %v152
    %v161 = vcombine.high %v159, %v159
    %v162 = vcombine.high %v108, %v108
    %v164 = vunpack.c.l.s4 1983009808
    %v165 = vunpack.c.0.s8 %v164
    %v166 = vlaneseq
    %v167 = vshrl.u32 %v166, 7
    %v168 = vsub.s32 %v165, %v167
    %v169 = vrot.slane %v108, %v168
    %v171 = vunpack.c.l.s4 1983009808
    %v172 = vunpack.c.0.s8 %v171
    %v173 = vlaneseq
    %v174 = vshrl.u32 %v173, 7
    %v175 = vsub.s32 %v172, %v174
    %v176 = vrot.slane %v162, %v175
    %v177 = vcombine.high %v169, %v169
    %v178 = vcombine.high %v176, %v176
    %v179 = vcombine.high %v109, %v109
    %v181 = vunpack.c.l.s4 1983009808
    %v182 = vunpack.c.0.s8 %v181
    %v183 = vlaneseq
    %v184 = vshrl.u32 %v183, 7
    %v185 = vsub.s32 %v182, %v184
    %v186 = vrot.slane %v109, %v185
    %v188 = vunpack.c.l.s4 1983009808
    %v189 = vunpack.c.0.s8 %v188
    %v190 = vlaneseq
    %v191 = vshrl.u32 %v190, 7
    %v192 = vsub.s32 %v189, %v191
    %v193 = vrot.slane %v179, %v192
    %v194 = vcombine.high %v186, %v186
    %v195 = vcombine.high %v193, %v193
    %vm212 = vcmask 25600
    %v213 = vsel %vm212, %v135, -inf
    %v214 = vrot.slane %v213, 4
    %v215 = vmax.f32 %v213, %v214
    %v216 = vrot.slane %v215, 2
    %v217 = vmax.f32 %v215, %v216
    %v218 = vrot.slane %v217, 1
    %v219 = vmax.f32 %v217, %v218
    %v220 = vsel %vm212, %v143, -inf
    %v221 = vrot.slane %v220, 4
    %v222 = vmax.f32 %v220, %v221
    %v223 = vrot.slane %v222, 2
    %v224 = vmax.f32 %v222, %v223
    %v225 = vrot.slane %v224, 1
    %v226 = vmax.f32 %v224, %v225
    %v227 = vsel %vm212, %v142, -inf
    %v228 = vrot.slane %v227, 4
    %v229 = vmax.f32 %v227, %v228
    %v230 = vrot.slane %v229, 2
    %v231 = vmax.f32 %v229, %v230
    %v232 = vrot.slane %v231, 1
    %v233 = vmax.f32 %v231, %v232
    %v234 = vsel %vm212, %v144, -inf
    %v235 = vrot.slane %v234, 4
    %v236 = vmax.f32 %v234, %v235
    %v237 = vrot.slane %v236, 2
    %v238 = vmax.f32 %v236, %v237
    %v239 = vrot.slane %v238, 1
    %v240 = vmax.f32 %v238, %v239
    %v241 = vsel %vm212, %v152, -inf
    %v242 = vrot.slane %v241, 4
    %v243 = vmax.f32 %v241, %v242
    %v244 = vrot.slane %v243, 2
    %v245 = vmax.f32 %v243, %v244
    %v246 = vrot.slane %v245, 1
    %v247 = vmax.f32 %v245, %v246
    %v248 = vsel %vm212, %v160, -inf
    %v249 = vrot.slane %v248, 4
    %v250 = vmax.f32 %v248, %v249
    %v251 = vrot.slane %v250, 2
    %v252 = vmax.f32 %v250, %v251
    %v253 = vrot.slane %v252, 1
    %v254 = vmax.f32 %v252, %v253
    %v255 = vsel %vm212, %v159, -inf
    %v256 = vrot.slane %v255, 4
    %v257 = vmax.f32 %v255, %v256
    %v258 = vrot.slane %v257, 2
    %v259 = vmax.f32 %v257, %v258
    %v260 = vrot.slane %v259, 1
    %v261 = vmax.f32 %v259, %v260
    %v262 = vsel %vm212, %v161, -inf
    %v263 = vrot.slane %v262, 4
    %v264 = vmax.f32 %v262, %v263
    %v265 = vrot.slane %v264, 2
    %v266 = vmax.f32 %v264, %v265
    %v267 = vrot.slane %v266, 1
    %v268 = vmax.f32 %v266, %v267
    %v269 = vsel %vm212, %v169, -inf
    %v270 = vrot.slane %v269, 4
    %v271 = vmax.f32 %v269, %v270
    %v272 = vrot.slane %v271, 2
    %v273 = vmax.f32 %v271, %v272
    %v274 = vrot.slane %v273, 1
    %v275 = vmax.f32 %v273, %v274
    %v276 = vsel %vm212, %v177, -inf
    %v277 = vrot.slane %v276, 4
    %v278 = vmax.f32 %v276, %v277
    %v279 = vrot.slane %v278, 2
    %v280 = vmax.f32 %v278, %v279
    %v281 = vrot.slane %v280, 1
    %v282 = vmax.f32 %v280, %v281
    %v283 = vsel %vm212, %v176, -inf
    %v284 = vrot.slane %v283, 4
    %v285 = vmax.f32 %v283, %v284
    %v286 = vrot.slane %v285, 2
    %v287 = vmax.f32 %v285, %v286
    %v288 = vrot.slane %v287, 1
    %v289 = vmax.f32 %v287, %v288
    %v290 = vsel %vm212, %v178, -inf
    %v291 = vrot.slane %v290, 4
    %v292 = vmax.f32 %v290, %v291
    %v293 = vrot.slane %v292, 2
    %v294 = vmax.f32 %v292, %v293
    %v295 = vrot.slane %v294, 1
    %v296 = vmax.f32 %v294, %v295
    %v297 = vsel %vm212, %v186, -inf
    %v298 = vrot.slane %v297, 4
    %v299 = vmax.f32 %v297, %v298
    %v300 = vrot.slane %v299, 2
    %v301 = vmax.f32 %v299, %v300
    %v302 = vrot.slane %v301, 1
    %v303 = vmax.f32 %v301, %v302
    %v304 = vsel %vm212, %v194, -inf
    %v305 = vrot.slane %v304, 4
    %v306 = vmax.f32 %v304, %v305
    %v307 = vrot.slane %v306, 2
    %v308 = vmax.f32 %v306, %v307
    %v309 = vrot.slane %v308, 1
    %v310 = vmax.f32 %v308, %v309
    %v311 = vsel %vm212, %v193, -inf
    %v312 = vrot.slane %v311, 4
    %v313 = vmax.f32 %v311, %v312
    %v314 = vrot.slane %v313, 2
    %v315 = vmax.f32 %v313, %v314
    %v316 = vrot.slane %v315, 1
    %v317 = vmax.f32 %v315, %v316
    %v318 = vsel %vm212, %v195, -inf
    %v319 = vrot.slane %v318, 4
    %v320 = vmax.f32 %v318, %v319
    %v321 = vrot.slane %v320, 2
    %v322 = vmax.f32 %v320, %v321
    %v323 = vrot.slane %v322, 1
    %v324 = vmax.f32 %v322, %v323
    %v325 = vlaneseq
    %v326 = vshrl.u32 %v325, 7
    %v327 = vadd.s32 %v326, 8
    %vm328 = vcmp.lt.s32.totalorder %v326, 0
    %v329 = vsub.s32 0, %v326
    %v330 = vsel %vm328, %v329, %v326
    %v331 = vshrl.u32 %v330, 3
    %v332 = vand.u32 %v330, 7
    %v333 = vsub.s32 0, %v332
    %v334 = vsel %vm328, %v333, %v332
    %vm335 = vcmp.lt.s32.totalorder %v327, 0
    %v336 = vsub.s32 0, %v327
    %v337 = vsel %vm335, %v336, %v327
    %v338 = vshrl.u32 %v337, 3
    %v339 = vand.u32 %v337, 7
    %v340 = vsub.s32 0, %v339
    %v341 = vsel %vm335, %v340, %v339
    %vm342 = vcmp.ne.s32.totalorder %v334, 0
    %vm343 = vcmp.ne.s32.totalorder %v341, 0
    %vm344 = vcmp.lt.s32.totalorder %v334, 0
    %vm345 = vcmp.lt.s32.totalorder %v341, 0
    %vm346 = vmand %vm344, %vm342
    %vm347 = vmand %vm345, %vm343
    %v348 = vadd.s32 %v334, 8
    %v349 = vadd.s32 %v341, 8
    %v350 = vsel %vm346, %v348, %v334
    %v351 = vsel %vm347, %v349, %v341
    %vm352 = vcmp.ne.s32.totalorder %v350, 0
    %vm353 = vcmp.ne.s32.totalorder %v351, 0
    %vm354 = vcmp.ne.s32.totalorder %v350, 7
    %vm355 = vcmp.ne.s32.totalorder %v351, 7
    %v356 = vld [vmem:[%s3] sm:$0xff]
    %v357 = vpack.c.bf16 %v219, %v219
    %v358 = vpack.c.bf16 %v226, %v226
    %v359 = vpack.c.bf16 %v233, %v233
    %v360 = vpack.c.bf16 %v240, %v240
    %v361 = vpack.c.bf16 %v247, %v247
    %v362 = vpack.c.bf16 %v254, %v254
    %v363 = vpack.c.bf16 %v261, %v261
    %v364 = vpack.c.bf16 %v268, %v268
    %v365 = vpack.c.bf16 %v275, %v275
    %v366 = vpack.c.bf16 %v282, %v282
    %v367 = vpack.c.bf16 %v289, %v289
    %v368 = vpack.c.bf16 %v296, %v296
    %v369 = vpack.c.bf16 %v303, %v303
    %v370 = vpack.c.bf16 %v310, %v310
    %v371 = vpack.c.bf16 %v317, %v317
    %v372 = vpack.c.bf16 %v324, %v324
    %v373 = vld [vmem:[#allocation5] sm:$0x3f]
    %v390 = vunpack.c.l.b16 %v357
    %v391 = vunpack.c.l.b16 %v358
    %v392 = vunpack.c.l.b16 %v359
    %v393 = vunpack.c.l.b16 %v360
    %v394 = vunpack.c.l.b16 %v361
    %v395 = vunpack.c.l.b16 %v362
    %v396 = vunpack.c.l.b16 %v363
    %v397 = vunpack.c.l.b16 %v364
    %v398 = vunpack.c.l.b16 %v365
    %v399 = vunpack.c.l.b16 %v366
    %v400 = vunpack.c.l.b16 %v367
    %v401 = vunpack.c.l.b16 %v368
    %v402 = vunpack.c.l.b16 %v369
    %v403 = vunpack.c.l.b16 %v370
    %v404 = vunpack.c.l.b16 %v371
    %v405 = vunpack.c.l.b16 %v372
    %vm406 = vcmask 1041409
    %v407 = vsel %vm406, %v391, %v390
    %vm408 = vcmask 1042434
    %v409 = vsel %vm408, %v392, %v407
    %vm410 = vcmask 1043459
    %v411 = vsel %vm410, %v393, %v409
    %vm412 = vcmask 1044484
    %v413 = vsel %vm412, %v394, %v411
    %vm414 = vcmask 1045509
    %v415 = vsel %vm414, %v395, %v413
    %vm416 = vcmask 1046534
    %v417 = vsel %vm416, %v396, %v415
    %vm418 = vcmask 1047559
    %v419 = vsel %vm418, %v397, %v417
    %v420 = vsel %vm406, %v399, %v398
    %v421 = vsel %vm408, %v400, %v420
    %v422 = vsel %vm410, %v401, %v421
    %v423 = vsel %vm412, %v402, %v422
    %v424 = vsel %vm414, %v403, %v423
    %v425 = vsel %vm416, %v404, %v424
    %v426 = vsel %vm418, %v405, %v425
    %v427 = vpack.c.b16 %v426, %v419
    %v429 = vcombine.high %v373, %v373
    %v431 = vunpack.c.l.s4 1983009808
    %v432 = vunpack.c.0.s8 %v431
    %v433 = vlaneseq
    %v434 = vshrl.u32 %v433, 7
    %v435 = vsub.s32 %v432, %v434
    %v436 = vrot.slane %v373, %v435
    %v438 = vunpack.c.l.s4 1983009808
    %v439 = vunpack.c.0.s8 %v438
    %v440 = vlaneseq
    %v441 = vshrl.u32 %v440, 7
    %v442 = vsub.s32 %v439, %v441
    %v443 = vrot.slane %v429, %v442
    %v444 = vcombine.high %v436, %v436
    %vm445 = vcmask 31744
    %v447 = vsel %vm445, %v427, 0
    %vm449 = vcmask 1041408
    %v451 = vsel %vm449, %v436, 0
    %v454 = vsel %vm449, %v444, 0
    %v457 = vsel %vm449, %v443, 0
    %459 = vmatprep.subr.bf16.mxu0 %v454
    %460 = vmatpush1.bf16.msra.mxu0 %v451
    %461 = vmatprep.subr.bf16.mxu0 0
    %462 = vmatpush1.bf16.msra.mxu0 0
    %463 = vmatprep.subr.bf16.mxu0 0
    %464 = vmatpush1.bf16.msra.mxu0 0
    %465 = vmatprep.subr.bf16.mxu0 0
    %466 = vmatpush1.bf16.msra.mxu0 0
    %467 = vmatprep.subr.bf16.mxu0 0
    %468 = vmatpush1.bf16.msra.mxu0 0
    %469 = vmatprep.subr.bf16.mxu0 0
    %470 = vmatpush1.bf16.msra.mxu0 0
    %471 = vmatprep.subr.bf16.mxu0 0
    %472 = vmatpush1.bf16.msra.mxu0 0
    %473 = vmatprep.subr.bf16.mxu0 0
    %474 = vmatpush1.bf16.msra.mxu0 0
    %475 = vmatprep.subr.bf16.mxu0 0
    %476 = vmatpush1.bf16.msra.mxu0 0
    %477 = vmatprep.subr.bf16.mxu0 0
    %478 = vmatpush1.bf16.msra.mxu0 0
    %479 = vmatprep.subr.bf16.mxu0 0
    %480 = vmatpush1.bf16.msra.mxu0 0
    %481 = vmatprep.subr.bf16.mxu0 0
    %482 = vmatpush1.bf16.msra.mxu0 0
    %483 = vmatprep.subr.bf16.mxu0 0
    %484 = vmatpush1.bf16.msra.mxu0 0
    %485 = vmatprep.subr.bf16.mxu0 0
    %486 = vmatpush1.bf16.msra.mxu0 0
    %487 = vmatprep.subr.bf16.mxu0 0
    %488 = vmatpush1.bf16.msra.mxu0 0
    %489 = vmatprep.subr.bf16.mxu0 0
    %490 = vmatpush1.bf16.msra.mxu0 0
    %491 = vmatprep.mubr.bf16.mxu0 0
    %492 = vmatmul.mubr.bf16.gmra.mrb[0].mxu0 %v447
    %v493 = vpop.f32.mrb[0].mxu0
    %v494 = vadd.f32 0.0, %v493
    %v495 = vpop.f32.mrb[0].mxu0
    %v496 = vadd.f32 0.0, %v495
    %v497 = vpop.f32.mrb[0].mxu0
    %v498 = vadd.f32 0.0, %v497
    %v499 = vpop.f32.mrb[0].mxu0
    %v500 = vadd.f32 0.0, %v499
    %501 = vdwg.mxu0
    %502 = vmatprep.subr.bf16.mxu0 0
    %503 = vmatpush1.bf16.msra.mxu0 %v457
    %504 = vmatprep.subr.bf16.mxu0 0
    %505 = vmatpush1.bf16.msra.mxu0 0
    %506 = vmatprep.subr.bf16.mxu0 0
    %507 = vmatpush1.bf16.msra.mxu0 0
    %508 = vmatprep.subr.bf16.mxu0 0
    %509 = vmatpush1.bf16.msra.mxu0 0
    %510 = vmatprep.subr.bf16.mxu0 0
    %511 = vmatpush1.bf16.msra.mxu0 0
    %512 = vmatprep.subr.bf16.mxu0 0
    %513 = vmatpush1.bf16.msra.mxu0 0
    %514 = vmatprep.subr.bf16.mxu0 0
    %515 = vmatpush1.bf16.msra.mxu0 0
    %516 = vmatprep.subr.bf16.mxu0 0
    %517 = vmatpush1.bf16.msra.mxu0 0
    %518 = vmatprep.subr.bf16.mxu0 0
    %519 = vmatpush1.bf16.msra.mxu0 0
    %520 = vmatprep.subr.bf16.mxu0 0
    %521 = vmatpush1.bf16.msra.mxu0 0
    %522 = vmatprep.subr.bf16.mxu0 0
    %523 = vmatpush1.bf16.msra.mxu0 0
    %524 = vmatprep.subr.bf16.mxu0 0
    %525 = vmatpush1.bf16.msra.mxu0 0
    %526 = vmatprep.subr.bf16.mxu0 0
    %527 = vmatpush1.bf16.msra.mxu0 0
    %528 = vmatprep.subr.bf16.mxu0 0
    %529 = vmatpush1.bf16.msra.mxu0 0
    %530 = vmatprep.subr.bf16.mxu0 0
    %531 = vmatpush1.bf16.msra.mxu0 0
    %532 = vmatprep.subr.bf16.mxu0 0
    %533 = vmatpush1.bf16.msra.mxu0 0
    %534 = vmatprep.mubr.bf16.mxu0 0
    %535 = vmatmul.mubr.bf16.gmra.mrb[0].mxu0 %v447
    %v536 = vpop.f32.mrb[0].mxu0
    %v537 = vadd.f32 0.0, %v536
    %v538 = vpop.f32.mrb[0].mxu0
    %v539 = vpop.f32.mrb[0].mxu0
    %v540 = vadd.f32 0.0, %v539
    %v541 = vpop.f32.mrb[0].mxu0
    %542 = vdwg.mxu0
    %v543 = vlaneseq
    %v544 = vshrl.u32 %v543, 7
    %v545 = vsub.s32 0, %v544
    %v546 = vrot.slane %v356, %v545
    %v547 = vadd.f32 %v496, %v546
    %v548 = vadd.f32 %v500, %v546
    %v549 = vrot.slane %v494, 7
    %v550 = vrot.slane %v498, 7
    %vm551 = vcmp.lt.s32.totalorder %v326, 1
    %v552 = vsel %vm551, %v549, %v550
    %v553 = vsel %vm551, %v550, %v549
    %v554 = vsel %vm352, 1, 0
    %v555 = vsel %vm353, 1, 0
    %vm556 = vcmp.eq.s32.totalorder %v554, 1
    %vm557 = vcmp.eq.s32.totalorder %v555, 1
    %v558 = vsel %vm556, %v553, 0.0
    %v559 = vsel %vm557, %v552, 0.0
    %v560 = vadd.f32 %v547, %v558
    %v561 = vadd.f32 %v548, %v559
    %v562 = vrot.slane %v537, 1
    %v563 = vrot.slane %v540, 1
    %vm564 = vcmp.lt.s32.totalorder %v326, 7
    %v565 = vsel %vm564, %v562, %v563
    %v566 = vsel %vm564, %v563, %v562
    %v567 = vsel %vm354, 1, 0
    %v568 = vsel %vm355, 1, 0
    %vm569 = vcmp.eq.s32.totalorder %v567, 1
    %vm570 = vcmp.eq.s32.totalorder %v568, 1
    %v571 = vsel %vm569, %v565, 0.0
    %v572 = vsel %vm570, %v566, 0.0
    %v573 = vadd.f32 %v560, %v571
    %v574 = vadd.f32 %v561, %v572
    %v575 = vrot.slane %v573, 4
    %v576 = vadd.f32 %v573, %v575
    %v577 = vrot.slane %v576, 2
    %v578 = vadd.f32 %v576, %v577
    %v579 = vrot.slane %v578, 1
    %v580 = vadd.f32 %v578, %v579
    %v581 = vrot.slane %v574, 4
    %v582 = vadd.f32 %v574, %v581
    %v583 = vrot.slane %v582, 2
    %v584 = vadd.f32 %v582, %v583
    %v585 = vrot.slane %v584, 1
    %v586 = vadd.f32 %v584, %v585
    %587 = vadd.xlane.f32.xlu0 %v580
    %v588 = vpop.xlane.xlu0 %587
    %589 = vadd.xlane.f32.xlu0 %v586
    %v590 = vpop.xlane.xlu0 %589
    %v591 = vmul.f32 %v573, %v573
    %v592 = vmul.f32 %v574, %v574
    %v593 = vrot.slane %v591, 4
    %v594 = vadd.f32 %v591, %v593
    %v595 = vrot.slane %v594, 2
    %v596 = vadd.f32 %v594, %v595
    %v597 = vrot.slane %v596, 1
    %v598 = vadd.f32 %v596, %v597
    %v599 = vrot.slane %v592, 4
    %v600 = vadd.f32 %v592, %v599
    %v601 = vrot.slane %v600, 2
    %v602 = vadd.f32 %v600, %v601
    %v603 = vrot.slane %v602, 1
    %v604 = vadd.f32 %v602, %v603
    %605 = vadd.xlane.f32.xlu0 %v598
    %v606 = vpop.xlane.xlu0 %605
    %607 = vadd.xlane.f32.xlu0 %v604
    %v608 = vpop.xlane.xlu0 %607
    %v609 = vmul.f32 %v588, 0.015625
    %v610 = vmul.f32 %v590, 0.015625
    %v611 = vmul.f32 %v606, 0.015625
    %v612 = vmul.f32 %v608, 0.015625
    %v613 = vmul.f32 %v609, %v609
    %v614 = vmul.f32 %v610, %v610
    %v615 = vsub.f32 %v611, %v613
    %v616 = vsub.f32 %v612, %v614
    %v617 = vmax.f32 %v615, 0.0
    %v618 = vmax.f32 %v616, 0.0
    %v619 = vsub.f32 %v573, %v609
    %v620 = vsub.f32 %v574, %v610
    %v621 = vadd.f32 %v617, 1e-05
    %v622 = vadd.f32 %v618, 1e-05
    %v623 = vrsqrt.pop %v621
    %v624 = vrsqrt.pop %v622
    %v625 = vmul.f32 %v619, %v623
    %v626 = vmul.f32 %v620, %v624
    %v627 = vlaneseq
    %v628 = vshrl.u32 %v627, 7
    %v629 = vsub.s32 1, %v628
    %v630 = vrot.slane %v356, %v629
    %v631 = vmul.f32 %v625, %v630
    %v632 = vmul.f32 %v626, %v630
    %v633 = vlaneseq
    %v634 = vshrl.u32 %v633, 7
    %v635 = vsub.s32 2, %v634
    %v636 = vrot.slane %v356, %v635
    %v637 = vadd.f32 %v631, %v636
    %v638 = vadd.f32 %v632, %v636
    %v639 = vmul.f32 %v637, 0.5
    %v640 = vmul.f32 %v638, 0.5
    %v641 = vmul.f32 %v637, 0.70710677
    %v642 = vmul.f32 %v638, 0.70710677
    %v643 = verf.f32.pop %v641
    %v644 = verf.f32.pop %v642
    %v645 = vadd.f32 %v643, 1.0
    %v646 = vadd.f32 %v644, 1.0
    %v647 = vmul.f32 %v639, %v645
    %v648 = vmul.f32 %v640, %v646
    %v649 = vpack.c.bf16 %v648, %v647
    %v650 = vld [vmem:[#allocation7] sm:$0xff]
    %v651 = vld [vmem:[#allocation7 + $0x8] sm:$0xf]
    %v652 = vld [vmem:[#allocation7 + $0xc] sm:$0xff]
    %v653 = vld [vmem:[#allocation7 + $0x14] sm:$0xf]
    %v654 = vld [vmem:[#allocation7 + $0x18] sm:$0xff]
    %v655 = vld [vmem:[#allocation7 + $0x20] sm:$0xf]
    %v656 = vld [vmem:[#allocation7 + $0x24] sm:$0xff]
    %v657 = vld [vmem:[#allocation7 + $0x2c] sm:$0xf]
    %v658 = vld [vmem:[#allocation7 + $0x30] sm:$0xff]
    %v659 = vld [vmem:[#allocation7 + $0x38] sm:$0xf]
    %v660 = vld [vmem:[#allocation7 + $0x3c] sm:$0xff]
    %v661 = vld [vmem:[#allocation7 + $0x44] sm:$0xf]
    %v662 = vld [vmem:[#allocation7 + $0x48] sm:$0xff]
    %v663 = vld [vmem:[#allocation7 + $0x50] sm:$0xf]
    %v664 = vld [vmem:[#allocation7 + $0x54] sm:$0xff]
    %v665 = vld [vmem:[#allocation7 + $0x5c] sm:$0xf]
    %v666 = vld [vmem:[#allocation7 + $0x60] sm:$0xff]
    %v667 = vld [vmem:[#allocation7 + $0x68] sm:$0xf]
    %v668 = vld [vmem:[#allocation7 + $0x6c] sm:$0xff]
    %v669 = vld [vmem:[#allocation7 + $0x74] sm:$0xf]
    %v670 = vld [vmem:[#allocation7 + $0x78] sm:$0xff]
    %v671 = vld [vmem:[#allocation7 + $0x80] sm:$0xf]
    %v672 = vld [vmem:[#allocation7 + $0x84] sm:$0xff]
    %v673 = vld [vmem:[#allocation7 + $0x8c] sm:$0xf]
    %v674 = vld [vmem:[#allocation7 + $0x90] sm:$0xff]
    %v675 = vld [vmem:[#allocation7 + $0x98] sm:$0xf]
    %v676 = vld [vmem:[#allocation7 + $0x9c] sm:$0xff]
    %v677 = vld [vmem:[#allocation7 + $0xa4] sm:$0xf]
    %v678 = vld [vmem:[#allocation7 + $0xa8] sm:$0xff]
    %v679 = vld [vmem:[#allocation7 + $0xb0] sm:$0xf]
    %v680 = vld [vmem:[#allocation7 + $0xb4] sm:$0xff]
    %v681 = vld [vmem:[#allocation7 + $0xbc] sm:$0xf]
    %v714 = vunpack.c.l.b16 %v650
    %v715 = vunpack.c.h.b16 %v650
    %v716 = vunpack.c.l.b16 %v651
    %v717 = vunpack.c.l.b16 %v652
    %v718 = vunpack.c.h.b16 %v652
    %v719 = vunpack.c.l.b16 %v653
    %v720 = vunpack.c.l.b16 %v654
    %v721 = vunpack.c.h.b16 %v654
    %v722 = vunpack.c.l.b16 %v655
    %v723 = vunpack.c.l.b16 %v656
    %v724 = vunpack.c.h.b16 %v656
    %v725 = vunpack.c.l.b16 %v657
    %v726 = vunpack.c.l.b16 %v658
    %v727 = vunpack.c.h.b16 %v658
    %v728 = vunpack.c.l.b16 %v659
    %v729 = vunpack.c.l.b16 %v660
    %v730 = vunpack.c.h.b16 %v660
    %v731 = vunpack.c.l.b16 %v661
    %v732 = vunpack.c.l.b16 %v662
    %v733 = vunpack.c.h.b16 %v662
    %v734 = vunpack.c.l.b16 %v663
    %v735 = vunpack.c.l.b16 %v664
    %v736 = vunpack.c.h.b16 %v664
    %v737 = vunpack.c.l.b16 %v665
    %v738 = vunpack.c.l.b16 %v666
    %v739 = vunpack.c.h.b16 %v666
    %v740 = vunpack.c.l.b16 %v667
    %v741 = vunpack.c.l.b16 %v668
    %v742 = vunpack.c.h.b16 %v668
    %v743 = vunpack.c.l.b16 %v669
    %v744 = vunpack.c.l.b16 %v670
    %v745 = vunpack.c.h.b16 %v670
    %v746 = vunpack.c.l.b16 %v671
    %v747 = vunpack.c.l.b16 %v672
    %v748 = vunpack.c.h.b16 %v672
    %v749 = vunpack.c.l.b16 %v673
    %v750 = vunpack.c.l.b16 %v674
    %v751 = vunpack.c.h.b16 %v674
    %v752 = vunpack.c.l.b16 %v675
    %v753 = vunpack.c.l.b16 %v676
    %v754 = vunpack.c.h.b16 %v676
    %v755 = vunpack.c.l.b16 %v677
    %v756 = vunpack.c.l.b16 %v678
    %v757 = vunpack.c.h.b16 %v678
    %v758 = vunpack.c.l.b16 %v679
    %v759 = vunpack.c.l.b16 %v680
    %v760 = vunpack.c.h.b16 %v680
    %v761 = vunpack.c.l.b16 %v681
    %v762 = vpack.c.b16 %v717, %v714
    %v763 = vpack.c.b16 %v718, %v715
    %v764 = vpack.c.b16 %v719, %v716
    %v765 = vpack.c.b16 %v723, %v720
    %v766 = vpack.c.b16 %v724, %v721
    %v767 = vpack.c.b16 %v725, %v722
    %v768 = vpack.c.b16 %v729, %v726
    %v769 = vpack.c.b16 %v730, %v727
    %v770 = vpack.c.b16 %v731, %v728
    %v771 = vpack.c.b16 %v735, %v732
    %v772 = vpack.c.b16 %v736, %v733
    %v773 = vpack.c.b16 %v737, %v734
    %v774 = vpack.c.b16 %v741, %v738
    %v775 = vpack.c.b16 %v742, %v739
    %v776 = vpack.c.b16 %v743, %v740
    %v777 = vpack.c.b16 %v747, %v744
    %v778 = vpack.c.b16 %v748, %v745
    %v779 = vpack.c.b16 %v749, %v746
    %v780 = vpack.c.b16 %v753, %v750
    %v781 = vpack.c.b16 %v754, %v751
    %v782 = vpack.c.b16 %v755, %v752
    %v783 = vpack.c.b16 %v759, %v756
    %v784 = vpack.c.b16 %v760, %v757
    %v785 = vpack.c.b16 %v761, %v758
    %810 = vmatprep.subr.bf16.mxu0 %v763
    %811 = vmatpush1.bf16.msra.mxu0 %v762
    %812 = vmatprep.subr.bf16.mxu0 %v766
    %813 = vmatpush1.bf16.msra.mxu0 %v765
    %814 = vmatprep.subr.bf16.mxu0 %v769
    %815 = vmatpush1.bf16.msra.mxu0 %v768
    %816 = vmatprep.subr.bf16.mxu0 %v772
    %817 = vmatpush1.bf16.msra.mxu0 %v771
    %818 = vmatprep.subr.bf16.mxu0 %v775
    %819 = vmatpush1.bf16.msra.mxu0 %v774
    %820 = vmatprep.subr.bf16.mxu0 %v778
    %821 = vmatpush1.bf16.msra.mxu0 %v777
    %822 = vmatprep.subr.bf16.mxu0 %v781
    %823 = vmatpush1.bf16.msra.mxu0 %v780
    %824 = vmatprep.subr.bf16.mxu0 %v784
    %825 = vmatpush1.bf16.msra.mxu0 %v783
    %826 = vmatprep.subr.bf16.mxu0 0
    %827 = vmatpush1.bf16.msra.mxu0 0
    %828 = vmatprep.subr.bf16.mxu0 0
    %829 = vmatpush1.bf16.msra.mxu0 0
    %830 = vmatprep.subr.bf16.mxu0 0
    %831 = vmatpush1.bf16.msra.mxu0 0
    %832 = vmatprep.subr.bf16.mxu0 0
    %833 = vmatpush1.bf16.msra.mxu0 0
    %834 = vmatprep.subr.bf16.mxu0 0
    %835 = vmatpush1.bf16.msra.mxu0 0
    %836 = vmatprep.subr.bf16.mxu0 0
    %837 = vmatpush1.bf16.msra.mxu0 0
    %838 = vmatprep.subr.bf16.mxu0 0
    %839 = vmatpush1.bf16.msra.mxu0 0
    %840 = vmatprep.subr.bf16.mxu0 0
    %841 = vmatpush1.bf16.msra.mxu0 0
    %842 = vmatprep.mubr.bf16.mxu0 0
    %843 = vmatmul.mubr.bf16.gmra.mrb[0].mxu0 %v649
    %v844 = vpop.f32.mrb[0].mxu0
    %v845 = vadd.f32 0.0, %v844
    %v846 = vpop.f32.mrb[0].mxu0
    %v847 = vadd.f32 0.0, %v846
    %v848 = vpop.f32.mrb[0].mxu0
    %v849 = vadd.f32 0.0, %v848
    %v850 = vpop.f32.mrb[0].mxu0
    %v851 = vadd.f32 0.0, %v850
    %852 = vdwg.mxu0
    %853 = vmatprep.subr.bf16.mxu0 0
    %854 = vmatpush1.bf16.msra.mxu0 %v764
    %855 = vmatprep.subr.bf16.mxu0 0
    %856 = vmatpush1.bf16.msra.mxu0 %v767
    %857 = vmatprep.subr.bf16.mxu0 0
    %858 = vmatpush1.bf16.msra.mxu0 %v770
    %859 = vmatprep.subr.bf16.mxu0 0
    %860 = vmatpush1.bf16.msra.mxu0 %v773
    %861 = vmatprep.subr.bf16.mxu0 0
    %862 = vmatpush1.bf16.msra.mxu0 %v776
    %863 = vmatprep.subr.bf16.mxu0 0
    %864 = vmatpush1.bf16.msra.mxu0 %v779
    %865 = vmatprep.subr.bf16.mxu0 0
    %866 = vmatpush1.bf16.msra.mxu0 %v782
    %867 = vmatprep.subr.bf16.mxu0 0
    %868 = vmatpush1.bf16.msra.mxu0 %v785
    %869 = vmatprep.subr.bf16.mxu0 0
    %870 = vmatpush1.bf16.msra.mxu0 0
    %871 = vmatprep.subr.bf16.mxu0 0
    %872 = vmatpush1.bf16.msra.mxu0 0
    %873 = vmatprep.subr.bf16.mxu0 0
    %874 = vmatpush1.bf16.msra.mxu0 0
    %875 = vmatprep.subr.bf16.mxu0 0
    %876 = vmatpush1.bf16.msra.mxu0 0
    %877 = vmatprep.subr.bf16.mxu0 0
    %878 = vmatpush1.bf16.msra.mxu0 0
    %879 = vmatprep.subr.bf16.mxu0 0
    %880 = vmatpush1.bf16.msra.mxu0 0
    %881 = vmatprep.subr.bf16.mxu0 0
    %882 = vmatpush1.bf16.msra.mxu0 0
    %883 = vmatprep.subr.bf16.mxu0 0
    %884 = vmatpush1.bf16.msra.mxu0 0
    %885 = vmatprep.mubr.bf16.mxu0 0
    %886 = vmatmul.mubr.bf16.gmra.mrb[0].mxu0 %v649
    %v887 = vpop.f32.mrb[0].mxu0
    %v888 = vadd.f32 0.0, %v887
    %v889 = vpop.f32.mrb[0].mxu0
    %v890 = vpop.f32.mrb[0].mxu0
    %v891 = vadd.f32 0.0, %v890
    %v892 = vpop.f32.mrb[0].mxu0
    %893 = vdwg.mxu0
    %v894 = vlaneseq
    %v895 = vshrl.u32 %v894, 7
    %v896 = vsub.s32 3, %v895
    %v897 = vrot.slane %v356, %v896
    %v898 = vadd.f32 %v847, %v897
    %v899 = vadd.f32 %v851, %v897
    %v900 = vrot.slane %v845, 7
    %v901 = vrot.slane %v849, 7
    %v902 = vsel %vm551, %v900, %v901
    %v903 = vsel %vm551, %v901, %v900
    %v904 = vsel %vm556, %v903, 0.0
    %v905 = vsel %vm557, %v902, 0.0
    %v906 = vadd.f32 %v898, %v904
    %v907 = vadd.f32 %v899, %v905
    %v908 = vrot.slane %v888, 1
    %v909 = vrot.slane %v891, 1
    %v910 = vsel %vm564, %v908, %v909
    %v911 = vsel %vm564, %v909, %v908
    %v912 = vsel %vm569, %v910, 0.0
    %v913 = vsel %vm570, %v911, 0.0
    %v914 = vadd.f32 %v906, %v912
    %v915 = vadd.f32 %v907, %v913
    %v916 = vrot.slane %v914, 4
    %v917 = vadd.f32 %v914, %v916
    %v918 = vrot.slane %v917, 2
    %v919 = vadd.f32 %v917, %v918
    %v920 = vrot.slane %v919, 1
    %v921 = vadd.f32 %v919, %v920
    %v922 = vrot.slane %v915, 4
    %v923 = vadd.f32 %v915, %v922
    %v924 = vrot.slane %v923, 2
    %v925 = vadd.f32 %v923, %v924
    %v926 = vrot.slane %v925, 1
    %v927 = vadd.f32 %v925, %v926
    %928 = vadd.xlane.f32.xlu0 %v921
    %v929 = vpop.xlane.xlu0 %928
    %930 = vadd.xlane.f32.xlu0 %v927
    %v931 = vpop.xlane.xlu0 %930
    %v932 = vmul.f32 %v914, %v914
    %v933 = vmul.f32 %v915, %v915
    %v934 = vrot.slane %v932, 4
    %v935 = vadd.f32 %v932, %v934
    %v936 = vrot.slane %v935, 2
    %v937 = vadd.f32 %v935, %v936
    %v938 = vrot.slane %v937, 1
    %v939 = vadd.f32 %v937, %v938
    %v940 = vrot.slane %v933, 4
    %v941 = vadd.f32 %v933, %v940
    %v942 = vrot.slane %v941, 2
    %v943 = vadd.f32 %v941, %v942
    %v944 = vrot.slane %v943, 1
    %v945 = vadd.f32 %v943, %v944
    %946 = vadd.xlane.f32.xlu0 %v939
    %v947 = vpop.xlane.xlu0 %946
    %948 = vadd.xlane.f32.xlu0 %v945
    %v949 = vpop.xlane.xlu0 %948
    %v950 = vmul.f32 %v929, 0.015625
    %v951 = vmul.f32 %v931, 0.015625
    %v952 = vmul.f32 %v947, 0.015625
    %v953 = vmul.f32 %v949, 0.015625
    %v954 = vmul.f32 %v950, %v950
    %v955 = vmul.f32 %v951, %v951
    %v956 = vsub.f32 %v952, %v954
    %v957 = vsub.f32 %v953, %v955
    %v958 = vmax.f32 %v956, 0.0
    %v959 = vmax.f32 %v957, 0.0
    %v960 = vsub.f32 %v914, %v950
    %v961 = vsub.f32 %v915, %v951
    %v962 = vadd.f32 %v958, 1e-05
    %v963 = vadd.f32 %v959, 1e-05
    %v964 = vrsqrt.pop %v962
    %v965 = vrsqrt.pop %v963
    %v966 = vmul.f32 %v960, %v964
    %v967 = vmul.f32 %v961, %v965
    %v968 = vlaneseq
    %v969 = vshrl.u32 %v968, 7
    %v970 = vsub.s32 4, %v969
    %v971 = vrot.slane %v356, %v970
    %v972 = vmul.f32 %v966, %v971
    %v973 = vmul.f32 %v967, %v971
    %v974 = vlaneseq
    %v975 = vshrl.u32 %v974, 7
    %v976 = vsub.s32 5, %v975
    %v977 = vrot.slane %v356, %v976
    %v978 = vadd.f32 %v972, %v977
    %v979 = vadd.f32 %v973, %v977
    %v980 = vmul.f32 %v978, 0.5
    %v981 = vmul.f32 %v979, 0.5
    %v982 = vmul.f32 %v978, 0.70710677
    %v983 = vmul.f32 %v979, 0.70710677
    %v984 = verf.f32.pop %v982
    %v985 = verf.f32.pop %v983
    %v986 = vadd.f32 %v984, 1.0
    %v987 = vadd.f32 %v985, 1.0
    %v988 = vmul.f32 %v980, %v986
    %v989 = vmul.f32 %v981, %v987
    %990 = vxpose.xlu0.b32.start [1/16] %v988, 128
    %991 = vxpose.xlu0.b32.cont [2/16] 0.0, 128
    %992 = vxpose.xlu0.b32.cont [3/16] 0.0, 128
    %993 = vxpose.xlu0.b32.cont [4/16] 0.0, 128
    %994 = vxpose.xlu0.b32.cont [5/16] 0.0, 128
    %995 = vxpose.xlu0.b32.cont [6/16] 0.0, 128
    %996 = vxpose.xlu0.b32.cont [7/16] 0.0, 128
    %997 = vxpose.xlu0.b32.cont [8/16] 0.0, 128
    %998 = vxpose.xlu0.b32.cont [9/16] 0.0, 128
    %999 = vxpose.xlu0.b32.cont [10/16] 0.0, 128
    %1000 = vxpose.xlu0.b32.cont [11/16] 0.0, 128
    %1001 = vxpose.xlu0.b32.cont [12/16] 0.0, 128
    %1002 = vxpose.xlu0.b32.cont [13/16] 0.0, 128
    %1003 = vxpose.xlu0.b32.cont [14/16] 0.0, 128
    %1004 = vxpose.xlu0.b32.cont [15/16] 0.0, 128
    %1005 = vxpose.xlu0.b32.end [16/16] 0.0, 128
    %v1006 = vpop.trf.xlu0
    %v1007 = vpop.trf.xlu0
    %v1008 = vpop.trf.xlu0
    %v1009 = vpop.trf.xlu0
    %v1010 = vpop.trf.xlu0
    %v1011 = vpop.trf.xlu0
    %v1012 = vpop.trf.xlu0
    %v1013 = vpop.trf.xlu0
    %v1014 = vpop.trf.xlu0
    %v1015 = vpop.trf.xlu0
    %v1016 = vpop.trf.xlu0
    %v1017 = vpop.trf.xlu0
    %v1018 = vpop.trf.xlu0
    %v1019 = vpop.trf.xlu0
    %v1020 = vpop.trf.xlu0
    %v1021 = vpop.trf.xlu0
    %1022 = vxpose.xlu0.b32.start [1/16] %v989, 128
    %1023 = vxpose.xlu0.b32.cont [2/16] 0.0, 128
    %1024 = vxpose.xlu0.b32.cont [3/16] 0.0, 128
    %1025 = vxpose.xlu0.b32.cont [4/16] 0.0, 128
    %1026 = vxpose.xlu0.b32.cont [5/16] 0.0, 128
    %1027 = vxpose.xlu0.b32.cont [6/16] 0.0, 128
    %1028 = vxpose.xlu0.b32.cont [7/16] 0.0, 128
    %1029 = vxpose.xlu0.b32.cont [8/16] 0.0, 128
    %1030 = vxpose.xlu0.b32.cont [9/16] 0.0, 128
    %1031 = vxpose.xlu0.b32.cont [10/16] 0.0, 128
    %1032 = vxpose.xlu0.b32.cont [11/16] 0.0, 128
    %1033 = vxpose.xlu0.b32.cont [12/16] 0.0, 128
    %1034 = vxpose.xlu0.b32.cont [13/16] 0.0, 128
    %1035 = vxpose.xlu0.b32.cont [14/16] 0.0, 128
    %1036 = vxpose.xlu0.b32.cont [15/16] 0.0, 128
    %1037 = vxpose.xlu0.b32.end [16/16] 0.0, 128
    %v1038 = vpop.trf.xlu0
    %v1039 = vpop.trf.xlu0
    %v1040 = vpop.trf.xlu0
    %v1041 = vpop.trf.xlu0
    %v1042 = vpop.trf.xlu0
    %v1043 = vpop.trf.xlu0
    %v1044 = vpop.trf.xlu0
    %v1045 = vpop.trf.xlu0
    %v1046 = vpop.trf.xlu0
    %v1047 = vpop.trf.xlu0
    %v1048 = vpop.trf.xlu0
    %v1049 = vpop.trf.xlu0
    %v1050 = vpop.trf.xlu0
    %v1051 = vpop.trf.xlu0
    %v1052 = vpop.trf.xlu0
    %v1053 = vpop.trf.xlu0
    %vm1054 = vcmask 64512
    %1055 = vst.msk [vmem:[#allocation8] sm:$0xff] %vm1054, %v1006
    %1056 = vst.msk [vmem:[#allocation8 + $0x8] sm:$0xff] %vm1054, %v1038
    // Predicated region
    $region30: #{tpu_custom_call.1} parent=1 // pred_check
      _
    $region31: #{tpu_custom_call.1} parent=1 // pred_check_branch
      %1058 = sbr.rel (0) target = $region33
    $region32: #{tpu_custom_call.1} parent=1 // pred_region
      %s1060 = ssub.s32 256, 256
      %1061 = vsyncadd [#allocation4], %s1060
      %s1062 = sshll.u32 [#allocation8], 4
      %s1063 = int_to_ptr.vmem [resolvable:$true] %s1062
      %1068 = dma.vmem_to_hbm [thread:$0]  %s1063, 256, %s4, [#allocation4], 128, 128, 8
    $region33: #{tpu_custom_call.1} parent=1 // pred_fallthru
      _
    // Predicated region
    $region34: #{tpu_custom_call.1} parent=1 // pred_check
      _
    $region35: #{tpu_custom_call.1} parent=1 // pred_check_branch
      %1070 = sbr.rel (0) target = $region37
    $region36: #{tpu_custom_call.1} parent=1 // pred_region
      %1071 = dma.done [#allocation4], 256
    $region37: #{tpu_custom_call.1} parent=1 // pred_fallthru
      _
    %1072 = vsyncpa [#allocation3], 1
    %1073 = vsyncpa [#allocation6], 1
    %1074 = vsyncpa [#allocation4], 1

</llo_original>
